<compile_context>
chip_gen: v7x
topology: tpu7x:2x2x1
jax: 0.10.0
libtpu: 0.0.40
codegen_flags: <defaults>
</compile_context>

<pallas_src>
import functools

import jax
import jax.numpy as jnp
from jax.experimental import pallas as pl
from jax.experimental.pallas import tpu as pltpu

B, S, H = 2, 8, 32
NUM_HEADS = 4
D_HEAD = H // NUM_HEADS
FFN = 64
LN_EPS = 1e-5
INV_SQRT2 = 0.7071067811865476

# Packed-weight slab layout (rows x lanes); each matrix sits on its own 128-lane band so
# the in-kernel static slices are tile-aligned:
#   [0:32,   0: 96]  W_qkv  (H, 3H)   [in, out], 1/sqrt(d_head) folded into the Q columns
#   [0:32, 128:160]  W_o    (H, H)    [in, out]
#   [0:32, 256:320]  W_1    (H, FFN)  [in, out]
#   [32:40,  0: 96]  ln1_w, ln1_b, ln2_w, ln2_b, b_o, b_2, b_1, b_qkv  (one row each)
SLAB_ROWS = H + 8          # 40
SLAB_COLS = 3 * 128        # 384
_WO_OFF = 128
_W1_OFF = 256


def _layer_norm(x, w, b):
    mean = jnp.mean(x, axis=-1, keepdims=True)
    var = jnp.mean((x - mean) ** 2, axis=-1, keepdims=True)
    return (x - mean) * jax.lax.rsqrt(var + LN_EPS) * w + b


def _gelu_exact(x):
    # nn.GELU() default = exact erf form (1/sqrt(2) hoisted as a constant multiply).
    return 0.5 * x * (1.0 + jax.lax.erf(x * INV_SQRT2))


def _make_kernel(nb):
    """Encoder-layer kernel for a block of `nb` batches (nb=B grid-less; nb=1 on the v7x grid)."""
    n_rows = nb * S

    def kernel(x_ref, wslab_ref, w2_ref, out_ref):
        # ---- unpack the packed weight/param slab (tile-aligned static slices) ----
        wqkv = wslab_ref[0:H, 0:3 * H]                     # (H, 3H)
        wo = wslab_ref[0:H, _WO_OFF:_WO_OFF + H]           # (H, H)
        w1 = wslab_ref[0:H, _W1_OFF:_W1_OFF + FFN]         # (H, FFN)
        prm = wslab_ref[H:H + 8, 0:3 * H]                  # (8, 3H)
        ln1_w, ln1_b = prm[0:1, :H], prm[1:2, :H]
        ln2_w, ln2_b = prm[2:3, :H], prm[3:4, :H]
        bo, b2 = prm[4:5, :H], prm[5:6, :H]
        b1 = prm[6:7, :FFN]
        bqkv = prm[7:8, :]                                 # (1, 3H)

        x = x_ref[...].reshape(n_rows, H)

        # ---- self-attention block ----
        y = _layer_norm(x, ln1_w, ln1_b)
        qkv = jnp.dot(y, wqkv, preferred_element_type=jnp.float32) + bqkv   # (R, 3H)
        qkv3 = qkv.reshape(nb, S, 3 * H)

        # Stack the heads onto the einsum batch axis (head-major): one score einsum,
        # one softmax and one PV einsum cover every (head, batch) pair.
        qh = jnp.concatenate(
            [qkv3[:, :, h * D_HEAD:(h + 1) * D_HEAD] for h in range(NUM_HEADS)], axis=0)
        kh = jnp.concatenate(
            [qkv3[:, :, H + h * D_HEAD:H + (h + 1) * D_HEAD] for h in range(NUM_HEADS)], axis=0)
        vh = jnp.concatenate(
            [qkv3[:, :, 2 * H + h * D_HEAD:2 * H + (h + 1) * D_HEAD]
             for h in range(NUM_HEADS)], axis=0)                            # (NH*nb, S, Dh)

        s = jnp.einsum("bqd,bkd->bqk", qh, kh,
                       preferred_element_type=jnp.float32)                  # (NH*nb, S, S)
        s = s - jnp.max(s, axis=-1, keepdims=True)
        p = jnp.exp(s)
        p = p * pl.reciprocal(jnp.sum(p, axis=-1, keepdims=True), approx=True)   # EUP
        o = jnp.einsum("bqk,bkd->bqd", p, vh,
                       preferred_element_type=jnp.float32)                  # (NH*nb, S, Dh)

        # Output projection: one batched einsum against the per-head row blocks of Wo,
        # then a tree-reduce over heads (no serial MXU dot+add chain, no lane-axis concat).
        o3 = o.reshape(NUM_HEADS, n_rows, D_HEAD)          # heads stay on the major axis
        wo3 = wo.reshape(NUM_HEADS, D_HEAD, H)
        attn = jnp.einsum("hrd,hdn->hrn", o3, wo3,
                          preferred_element_type=jnp.float32)               # (NH, R, H)
        attn = jnp.sum(attn, axis=0) + bo
        x = x + attn

        # ---- feed-forward block ----
        y = _layer_norm(x, ln2_w, ln2_b)
        y = jnp.dot(y, w1, preferred_element_type=jnp.float32) + b1
        y = _gelu_exact(y)
        y = jnp.dot(y, w2_ref[...], preferred_element_type=jnp.float32) + b2
        out_ref[...] = (x + y).reshape(nb, S, H)

    return kernel


@functools.lru_cache(maxsize=None)
def _encoder_call():
    """Build the pallas_call once (cached) so the per-forward path is just the kernel launch."""
    try:
        # v7x has 2 TensorCores per chip: split the (independent) batch axis across them.
        use_batch_grid = "v7" in jax.devices()[0].device_kind.lower()
    except Exception:
        use_batch_grid = False

    if use_batch_grid:
        call = pl.pallas_call(
            _make_kernel(1),
            out_shape=jax.ShapeDtypeStruct((B, S, H), jnp.float32),
            grid=(B,),
            in_specs=[
                pl.BlockSpec((1, S, H), lambda b: (b, 0, 0)),
                pl.BlockSpec((SLAB_ROWS, SLAB_COLS), lambda b: (0, 0)),   # replicated
                pl.BlockSpec((FFN, H), lambda b: (0, 0)),                 # replicated
            ],
            out_specs=pl.BlockSpec((1, S, H), lambda b: (b, 0, 0)),
            compiler_params=pltpu.CompilerParams(dimension_semantics=("parallel",)),
        )
    else:
        # v5e / v6e: single TensorCore, so a grid is just a sequential loop with per-step
        # overhead; keep the whole layer in one grid-less invocation.
        call = pl.pallas_call(
            _make_kernel(B),
            out_shape=jax.ShapeDtypeStruct((B, S, H), jnp.float32),
        )
    return jax.jit(call)


def prepare_params(params):
    """One-time host-side packing (call at parameter-load time, NOT per forward)."""
    scale = jnp.float32(D_HEAD ** -0.5)
    # PyTorch-style [out, in] weights -> [in, out]; QKV fused; attention scale folded into Q.
    w_qkv = jnp.concatenate(
        [params["wq"].T * scale, params["wk"].T, params["wv"].T], axis=1)        # (H, 3H)
    b_qkv = jnp.concatenate([params["bq"] * scale, params["bk"], params["bv"]])  # (3H,)

    wslab = jnp.zeros((SLAB_ROWS, SLAB_COLS), jnp.float32)
    wslab = wslab.at[0:H, 0:3 * H].set(w_qkv)
    wslab = wslab.at[0:H, _WO_OFF:_WO_OFF + H].set(params["wo"].T)
    wslab = wslab.at[0:H, _W1_OFF:_W1_OFF + FFN].set(params["w1"].T)
    wslab = wslab.at[H + 0, 0:H].set(params["ln1_w"])
    wslab = wslab.at[H + 1, 0:H].set(params["ln1_b"])
    wslab = wslab.at[H + 2, 0:H].set(params["ln2_w"])
    wslab = wslab.at[H + 3, 0:H].set(params["ln2_b"])
    wslab = wslab.at[H + 4, 0:H].set(params["bo"])
    wslab = wslab.at[H + 5, 0:H].set(params["b2"])
    wslab = wslab.at[H + 6, 0:FFN].set(params["b1"])
    wslab = wslab.at[H + 7, 0:3 * H].set(b_qkv)

    w2_t = params["w2"].T                                                        # (FFN, H)
    return wslab, w2_t


def encoder_layer(x, packed):
    """EncoderLayer forward; `packed` is the result of prepare_params()."""
    wslab, w2_t = packed
    return _encoder_call()(x, wslab, w2_t)


def _init_params(key):
    ks = jax.random.split(key, 16)
    std = 0.02
    bstd = 0.05
    return {
        "ln1_w": 1.0 + bstd * jax.random.normal(ks[0], (H,), jnp.float32),
        "ln1_b": bstd * jax.random.normal(ks[1], (H,), jnp.float32),
        "wq": std * jax.random.normal(ks[2], (H, H), jnp.float32),
        "bq": bstd * jax.random.normal(ks[3], (H,), jnp.float32),
        "wk": std * jax.random.normal(ks[4], (H, H), jnp.float32),
        "bk": bstd * jax.random.normal(ks[5], (H,), jnp.float32),
        "wv": std * jax.random.normal(ks[6], (H, H), jnp.float32),
        "bv": bstd * jax.random.normal(ks[7], (H,), jnp.float32),
        "wo": std * jax.random.normal(ks[8], (H, H), jnp.float32),
        "bo": bstd * jax.random.normal(ks[9], (H,), jnp.float32),
        "ln2_w": 1.0 + bstd * jax.random.normal(ks[10], (H,), jnp.float32),
        "ln2_b": bstd * jax.random.normal(ks[11], (H,), jnp.float32),
        "w1": std * jax.random.normal(ks[12], (FFN, H), jnp.float32),
        "b1": bstd * jax.random.normal(ks[13], (FFN,), jnp.float32),
        "w2": std * jax.random.normal(ks[14], (H, FFN), jnp.float32),
        "b2": bstd * jax.random.normal(ks[15], (H,), jnp.float32),
    }


def _reference(x, p):
    """Pure-JAX port of the PyTorch EncoderLayer forward (attn_bias=None, eval mode)."""
    def ln(t, w, b):
        m = t.mean(-1, keepdims=True)
        v = ((t - m) ** 2).mean(-1, keepdims=True)
        return (t - m) / jnp.sqrt(v + LN_EPS) * w + b

    y = ln(x, p["ln1_w"], p["ln1_b"])
    q = y @ p["wq"].T + p["bq"]
    k = y @ p["wk"].T + p["bk"]
    v = y @ p["wv"].T + p["bv"]
    q = q.reshape(B, S, NUM_HEADS, D_HEAD).transpose(0, 2, 1, 3) * (D_HEAD ** -0.5)
    k = k.reshape(B, S, NUM_HEADS, D_HEAD).transpose(0, 2, 1, 3)
    v = v.reshape(B, S, NUM_HEADS, D_HEAD).transpose(0, 2, 1, 3)
    s = jnp.einsum("bhqd,bhkd->bhqk", q, k)
    a = jax.nn.softmax(s, axis=-1)
    o = jnp.einsum("bhqk,bhkd->bhqd", a, v).transpose(0, 2, 1, 3).reshape(B, S, H)
    o = o @ p["wo"].T + p["bo"]
    x = x + o
    y = ln(x, p["ln2_w"], p["ln2_b"])
    y = y @ p["w1"].T + p["b1"]
    y = 0.5 * y * (1.0 + jax.lax.erf(y / jnp.sqrt(2.0)))
    y = y @ p["w2"].T + p["b2"]
    return x + y


if __name__ == "__main__":
    key = jax.random.PRNGKey(0)
    kx, kp = jax.random.split(key)
    x = jax.random.normal(kx, (B, S, H), jnp.float32)
    params = _init_params(kp)

    packed = jax.block_until_ready(prepare_params(params))   # one-time packing
    out = encoder_layer(x, packed)
    out = jax.block_until_ready(out)

    ref = _reference(x, params)
    assert out.shape == (B, S, H)
    assert jnp.allclose(out, ref, rtol=1e-4, atol=1e-4), "mismatch vs reference"
    print("KERNEL_OK")
</pallas_src>

<mosaic_0001>
module attributes {stable_mosaic.version = 11 : i64} {
  func.func @kernel(%arg0: memref<2x8x32xf32, #tpu.memory_space<vmem>>, %arg1: memref<40x384xf32, #tpu.memory_space<vmem>>, %arg2: memref<64x32xf32, #tpu.memory_space<vmem>>, %arg3: memref<2x8x32xf32, #tpu.memory_space<vmem>>) attributes {dimension_semantics = [], scalar_prefetch = 0 : i64, scratch_operands = 0 : i64, tpu.core_type = #tpu.core_type<tc>} {
    %c0 = arith.constant 0 : index
    %c0_0 = arith.constant 0 : index
    %0 = vector.load %arg1[%c0, %c0_0] : memref<40x384xf32, #tpu.memory_space<vmem>>, vector<32x96xf32>
    %c0_1 = arith.constant 0 : index
    %c128 = arith.constant 128 : index
    %1 = vector.load %arg1[%c0_1, %c128] : memref<40x384xf32, #tpu.memory_space<vmem>>, vector<32x32xf32>
    %c0_2 = arith.constant 0 : index
    %c256 = arith.constant 256 : index
    %2 = vector.load %arg1[%c0_2, %c256] : memref<40x384xf32, #tpu.memory_space<vmem>>, vector<32x64xf32>
    %c32 = arith.constant 32 : index
    %c0_3 = arith.constant 0 : index
    %3 = vector.load %arg1[%c32, %c0_3] : memref<40x384xf32, #tpu.memory_space<vmem>>, vector<8x96xf32>
    %4 = vector.extract_strided_slice %3 {offsets = [0, 0], sizes = [1, 32], strides = [1, 1]} : vector<8x96xf32> to vector<1x32xf32>
    %5 = vector.extract_strided_slice %3 {offsets = [1, 0], sizes = [1, 32], strides = [1, 1]} : vector<8x96xf32> to vector<1x32xf32>
    %6 = vector.extract_strided_slice %3 {offsets = [2, 0], sizes = [1, 32], strides = [1, 1]} : vector<8x96xf32> to vector<1x32xf32>
    %7 = vector.extract_strided_slice %3 {offsets = [3, 0], sizes = [1, 32], strides = [1, 1]} : vector<8x96xf32> to vector<1x32xf32>
    %8 = vector.extract_strided_slice %3 {offsets = [4, 0], sizes = [1, 32], strides = [1, 1]} : vector<8x96xf32> to vector<1x32xf32>
    %9 = vector.extract_strided_slice %3 {offsets = [5, 0], sizes = [1, 32], strides = [1, 1]} : vector<8x96xf32> to vector<1x32xf32>
    %10 = vector.extract_strided_slice %3 {offsets = [6, 0], sizes = [1, 64], strides = [1, 1]} : vector<8x96xf32> to vector<1x64xf32>
    %11 = vector.extract_strided_slice %3 {offsets = [7, 0], sizes = [1, 96], strides = [1, 1]} : vector<8x96xf32> to vector<1x96xf32>
    %c0_4 = arith.constant 0 : index
    %c0_5 = arith.constant 0 : index
    %c0_6 = arith.constant 0 : index
    %12 = vector.load %arg0[%c0_4, %c0_5, %c0_6] : memref<2x8x32xf32, #tpu.memory_space<vmem>>, vector<2x8x32xf32>
    %13 = vector.shape_cast %12 : vector<2x8x32xf32> to vector<16x32xf32>
    %cst = arith.constant dense<0.000000e+00> : vector<16xf32>
    %14 = vector.multi_reduction <add>, %13, %cst [1] : vector<16x32xf32> to vector<16xf32>
    %15 = vector.shape_cast %14 : vector<16xf32> to vector<16x1xf32>
    %cst_7 = arith.constant 3.200000e+01 : f32
    %16 = vector.broadcast %cst_7 : f32 to vector<16x1xf32>
    %17 = arith.divf %15, %16 : vector<16x1xf32>
    %18 = vector.broadcast %17 : vector<16x1xf32> to vector<16x32xf32>
    %19 = arith.subf %13, %18 : vector<16x32xf32>
    %20 = arith.mulf %19, %19 : vector<16x32xf32>
    %cst_8 = arith.constant dense<0.000000e+00> : vector<16xf32>
    %21 = vector.multi_reduction <add>, %20, %cst_8 [1] : vector<16x32xf32> to vector<16xf32>
    %22 = vector.shape_cast %21 : vector<16xf32> to vector<16x1xf32>
    %cst_9 = arith.constant 3.200000e+01 : f32
    %23 = vector.broadcast %cst_9 : f32 to vector<16x1xf32>
    %24 = arith.divf %22, %23 : vector<16x1xf32>
    %25 = vector.broadcast %17 : vector<16x1xf32> to vector<16x32xf32>
    %26 = arith.subf %13, %25 : vector<16x32xf32>
    %cst_10 = arith.constant 9.99999974E-6 : f32
    %27 = vector.broadcast %cst_10 : f32 to vector<16x1xf32>
    %28 = arith.addf %24, %27 : vector<16x1xf32>
    %29 = math.rsqrt %28 : vector<16x1xf32>
    %30 = vector.broadcast %29 : vector<16x1xf32> to vector<16x32xf32>
    %31 = arith.mulf %26, %30 : vector<16x32xf32>
    %32 = vector.broadcast %4 : vector<1x32xf32> to vector<16x32xf32>
    %33 = arith.mulf %31, %32 : vector<16x32xf32>
    %34 = vector.broadcast %5 : vector<1x32xf32> to vector<16x32xf32>
    %35 = arith.addf %33, %34 : vector<16x32xf32>
    %cst_11 = arith.constant dense<0.000000e+00> : vector<16x96xf32>
    %36 = tpu.matmul %35, %0, %cst_11 {dimension_numbers = #tpu.dot_dimension_numbers<[1], [0], [0], [1], [0, 0, 1, 1], [], []>} : vector<16x32xf32>, vector<32x96xf32>, vector<16x96xf32> -> vector<16x96xf32>
    %37 = vector.broadcast %11 : vector<1x96xf32> to vector<16x96xf32>
    %38 = arith.addf %36, %37 : vector<16x96xf32>
    %39 = vector.shape_cast %38 : vector<16x96xf32> to vector<2x8x96xf32>
    %40 = vector.extract_strided_slice %39 {offsets = [0, 0, 0], sizes = [2, 8, 8], strides = [1, 1, 1]} : vector<2x8x96xf32> to vector<2x8x8xf32>
    %41 = vector.extract_strided_slice %39 {offsets = [0, 0, 8], sizes = [2, 8, 8], strides = [1, 1, 1]} : vector<2x8x96xf32> to vector<2x8x8xf32>
    %42 = vector.extract_strided_slice %39 {offsets = [0, 0, 16], sizes = [2, 8, 8], strides = [1, 1, 1]} : vector<2x8x96xf32> to vector<2x8x8xf32>
    %43 = vector.extract_strided_slice %39 {offsets = [0, 0, 24], sizes = [2, 8, 8], strides = [1, 1, 1]} : vector<2x8x96xf32> to vector<2x8x8xf32>
    %44 = tpu.concatenate %40, %41, %42, %43 in 0 : vector<2x8x8xf32>, vector<2x8x8xf32>, vector<2x8x8xf32>, vector<2x8x8xf32> -> vector<8x8x8xf32>
    %45 = vector.extract_strided_slice %39 {offsets = [0, 0, 32], sizes = [2, 8, 8], strides = [1, 1, 1]} : vector<2x8x96xf32> to vector<2x8x8xf32>
    %46 = vector.extract_strided_slice %39 {offsets = [0, 0, 40], sizes = [2, 8, 8], strides = [1, 1, 1]} : vector<2x8x96xf32> to vector<2x8x8xf32>
    %47 = vector.extract_strided_slice %39 {offsets = [0, 0, 48], sizes = [2, 8, 8], strides = [1, 1, 1]} : vector<2x8x96xf32> to vector<2x8x8xf32>
    %48 = vector.extract_strided_slice %39 {offsets = [0, 0, 56], sizes = [2, 8, 8], strides = [1, 1, 1]} : vector<2x8x96xf32> to vector<2x8x8xf32>
    %49 = tpu.concatenate %45, %46, %47, %48 in 0 : vector<2x8x8xf32>, vector<2x8x8xf32>, vector<2x8x8xf32>, vector<2x8x8xf32> -> vector<8x8x8xf32>
    %50 = vector.extract_strided_slice %39 {offsets = [0, 0, 64], sizes = [2, 8, 8], strides = [1, 1, 1]} : vector<2x8x96xf32> to vector<2x8x8xf32>
    %51 = vector.extract_strided_slice %39 {offsets = [0, 0, 72], sizes = [2, 8, 8], strides = [1, 1, 1]} : vector<2x8x96xf32> to vector<2x8x8xf32>
    %52 = vector.extract_strided_slice %39 {offsets = [0, 0, 80], sizes = [2, 8, 8], strides = [1, 1, 1]} : vector<2x8x96xf32> to vector<2x8x8xf32>
    %53 = vector.extract_strided_slice %39 {offsets = [0, 0, 88], sizes = [2, 8, 8], strides = [1, 1, 1]} : vector<2x8x96xf32> to vector<2x8x8xf32>
    %54 = tpu.concatenate %50, %51, %52, %53 in 0 : vector<2x8x8xf32>, vector<2x8x8xf32>, vector<2x8x8xf32>, vector<2x8x8xf32> -> vector<8x8x8xf32>
    "tpu.trace_start"() <{level = 10 : i32, message = "bqd,bkd->bqk"}> : () -> ()
    %cst_12 = arith.constant dense<0.000000e+00> : vector<8x8x8xf32>
    %55 = tpu.matmul %44, %49, %cst_12 {dimension_numbers = #tpu.dot_dimension_numbers<[2], [2], [1], [1], [0, 0, 0, 1, 1, 1], [0], [0]>} : vector<8x8x8xf32>, vector<8x8x8xf32>, vector<8x8x8xf32> -> vector<8x8x8xf32>
    "tpu.trace_stop"() : () -> ()
    %cst_13 = arith.constant dense<0xFF800000> : vector<8x8xf32>
    %56 = vector.multi_reduction <maximumf>, %55, %cst_13 [2] : vector<8x8x8xf32> to vector<8x8xf32>
    %57 = vector.shape_cast %56 : vector<8x8xf32> to vector<8x8x1xf32>
    %58 = vector.broadcast %57 : vector<8x8x1xf32> to vector<8x8x8xf32>
    %59 = arith.subf %55, %58 : vector<8x8x8xf32>
    %60 = math.exp %59 : vector<8x8x8xf32>
    %cst_14 = arith.constant dense<0.000000e+00> : vector<8x8xf32>
    %61 = vector.multi_reduction <add>, %60, %cst_14 [2] : vector<8x8x8xf32> to vector<8x8xf32>
    %62 = vector.shape_cast %61 : vector<8x8xf32> to vector<8x8x1xf32>
    %63 = tpu.reciprocal %62 {approx = true} : vector<8x8x1xf32> -> vector<8x8x1xf32>
    %64 = vector.broadcast %63 : vector<8x8x1xf32> to vector<8x8x8xf32>
    %65 = arith.mulf %60, %64 : vector<8x8x8xf32>
    "tpu.trace_start"() <{level = 10 : i32, message = "bqk,bkd->bqd"}> : () -> ()
    %cst_15 = arith.constant dense<0.000000e+00> : vector<8x8x8xf32>
    %66 = tpu.matmul %65, %54, %cst_15 {dimension_numbers = #tpu.dot_dimension_numbers<[2], [1], [1], [2], [0, 0, 0, 1, 1, 2], [0], [0]>} : vector<8x8x8xf32>, vector<8x8x8xf32>, vector<8x8x8xf32> -> vector<8x8x8xf32>
    "tpu.trace_stop"() : () -> ()
    %67 = vector.shape_cast %66 : vector<8x8x8xf32> to vector<4x16x8xf32>
    %68 = vector.shape_cast %1 : vector<32x32xf32> to vector<4x8x32xf32>
    "tpu.trace_start"() <{level = 10 : i32, message = "hrd,hdn->hrn"}> : () -> ()
    %cst_16 = arith.constant dense<0.000000e+00> : vector<4x16x32xf32>
    %69 = tpu.matmul %67, %68, %cst_16 {dimension_numbers = #tpu.dot_dimension_numbers<[2], [1], [1], [2], [0, 0, 0, 1, 1, 2], [0], [0]>} : vector<4x16x8xf32>, vector<4x8x32xf32>, vector<4x16x32xf32> -> vector<4x16x32xf32>
    "tpu.trace_stop"() : () -> ()
    %cst_17 = arith.constant dense<0.000000e+00> : vector<16x32xf32>
    %70 = vector.multi_reduction <add>, %69, %cst_17 [0] : vector<4x16x32xf32> to vector<16x32xf32>
    %71 = vector.broadcast %8 : vector<1x32xf32> to vector<16x32xf32>
    %72 = arith.addf %70, %71 : vector<16x32xf32>
    %73 = arith.addf %13, %72 : vector<16x32xf32>
    %cst_18 = arith.constant dense<0.000000e+00> : vector<16xf32>
    %74 = vector.multi_reduction <add>, %73, %cst_18 [1] : vector<16x32xf32> to vector<16xf32>
    %75 = vector.shape_cast %74 : vector<16xf32> to vector<16x1xf32>
    %cst_19 = arith.constant 3.200000e+01 : f32
    %76 = vector.broadcast %cst_19 : f32 to vector<16x1xf32>
    %77 = arith.divf %75, %76 : vector<16x1xf32>
    %78 = vector.broadcast %77 : vector<16x1xf32> to vector<16x32xf32>
    %79 = arith.subf %73, %78 : vector<16x32xf32>
    %80 = arith.mulf %79, %79 : vector<16x32xf32>
    %cst_20 = arith.constant dense<0.000000e+00> : vector<16xf32>
    %81 = vector.multi_reduction <add>, %80, %cst_20 [1] : vector<16x32xf32> to vector<16xf32>
    %82 = vector.shape_cast %81 : vector<16xf32> to vector<16x1xf32>
    %cst_21 = arith.constant 3.200000e+01 : f32
    %83 = vector.broadcast %cst_21 : f32 to vector<16x1xf32>
    %84 = arith.divf %82, %83 : vector<16x1xf32>
    %85 = vector.broadcast %77 : vector<16x1xf32> to vector<16x32xf32>
    %86 = arith.subf %73, %85 : vector<16x32xf32>
    %cst_22 = arith.constant 9.99999974E-6 : f32
    %87 = vector.broadcast %cst_22 : f32 to vector<16x1xf32>
    %88 = arith.addf %84, %87 : vector<16x1xf32>
    %89 = math.rsqrt %88 : vector<16x1xf32>
    %90 = vector.broadcast %89 : vector<16x1xf32> to vector<16x32xf32>
    %91 = arith.mulf %86, %90 : vector<16x32xf32>
    %92 = vector.broadcast %6 : vector<1x32xf32> to vector<16x32xf32>
    %93 = arith.mulf %91, %92 : vector<16x32xf32>
    %94 = vector.broadcast %7 : vector<1x32xf32> to vector<16x32xf32>
    %95 = arith.addf %93, %94 : vector<16x32xf32>
    %cst_23 = arith.constant dense<0.000000e+00> : vector<16x64xf32>
    %96 = tpu.matmul %95, %2, %cst_23 {dimension_numbers = #tpu.dot_dimension_numbers<[1], [0], [0], [1], [0, 0, 1, 1], [], []>} : vector<16x32xf32>, vector<32x64xf32>, vector<16x64xf32> -> vector<16x64xf32>
    %97 = vector.broadcast %10 : vector<1x64xf32> to vector<16x64xf32>
    %98 = arith.addf %96, %97 : vector<16x64xf32>
    %cst_24 = arith.constant 5.000000e-01 : f32
    %99 = vector.broadcast %cst_24 : f32 to vector<16x64xf32>
    %100 = arith.mulf %99, %98 : vector<16x64xf32>
    %cst_25 = arith.constant 0.707106769 : f32
    %101 = vector.broadcast %cst_25 : f32 to vector<16x64xf32>
    %102 = arith.mulf %98, %101 : vector<16x64xf32>
    %103 = math.erf %102 : vector<16x64xf32>
    %cst_26 = arith.constant 1.000000e+00 : f32
    %104 = vector.broadcast %cst_26 : f32 to vector<16x64xf32>
    %105 = arith.addf %104, %103 : vector<16x64xf32>
    %106 = arith.mulf %100, %105 : vector<16x64xf32>
    %c0_27 = arith.constant 0 : index
    %c0_28 = arith.constant 0 : index
    %107 = vector.load %arg2[%c0_27, %c0_28] : memref<64x32xf32, #tpu.memory_space<vmem>>, vector<64x32xf32>
    %cst_29 = arith.constant dense<0.000000e+00> : vector<16x32xf32>
    %108 = tpu.matmul %106, %107, %cst_29 {dimension_numbers = #tpu.dot_dimension_numbers<[1], [0], [0], [1], [0, 0, 1, 1], [], []>} : vector<16x64xf32>, vector<64x32xf32>, vector<16x32xf32> -> vector<16x32xf32>
    %109 = vector.broadcast %9 : vector<1x32xf32> to vector<16x32xf32>
    %110 = arith.addf %108, %109 : vector<16x32xf32>
    %111 = arith.addf %73, %110 : vector<16x32xf32>
    %112 = vector.shape_cast %111 : vector<16x32xf32> to vector<2x8x32xf32>
    %c0_30 = arith.constant 0 : index
    %c0_31 = arith.constant 0 : index
    %c0_32 = arith.constant 0 : index
    %113 = vector.load %arg3[%c0_30, %c0_31, %c0_32] : memref<2x8x32xf32, #tpu.memory_space<vmem>>, vector<2x8x32xf32>
    tpu.vector_store %arg3[%c0_30, %c0_31, %c0_32], %112 {strides = array<i32>} : memref<2x8x32xf32, #tpu.memory_space<vmem>>, vector<2x8x32xf32>,
    return
  }
}

</mosaic_0001>

<llo_original>
// kernel: tpu_custom_call.1
$region0: #{tpu_custom_call.1}
  #allocation0 [shape = 'u32[]', space=smem, size = 0x4, offset = 0x4, fixed_abs, tag = 'smem constant byte address 0x4 - core index']
  #allocation1 [shape = 'u32[144,128]{1,0:T(1,128)}', space=vmem, size = 0x12000, scoped, tag = 'internal scratch']
  %s0 = inlined_call_operand.vmem [shape: f32[2,8,32], index: 0, kind: input, shape index: {}]
  %s1 = inlined_call_operand.hbm [shape: f32[40,384], index: 1, kind: input, shape index: {}]
  %s2 = inlined_call_operand.vmem [shape: f32[64,32], index: 2, kind: input, shape index: {}]
  %s3 = inlined_call_operand.hbm [shape: f32[2,8,32], index: 3, kind: output, shape index: {}]
  %s4 = sld [smem:[#allocation0]]
  $region26: #{tpu_custom_call.1} parent=0
    _
  %s6 = ssub.s32 1, %s4
  %s7 = scalar_select 0, %s6, %s4
  $region1: #{tpu_custom_call.1} parent=0
    #allocation2 [shape = 'u8[61440]{0}', space=vmem, size = 0xf000, scoped, tag = 'input window, operand 1, single buffered']
    #allocation3 [shape = 's32[1]{0}', space=sflag, size = 0x4, scoped, tag = 'scoped memory for tpu_custom_call.1']
    #allocation4 [shape = 's32[1]{0}', space=sflag, size = 0x4, scoped, tag = 'scoped memory for tpu_custom_call.1']
    #allocation5 [shape = 'u8[8192]{0}', space=vmem, size = 0x2000, scoped, tag = 'output window, operand 0, single buffered']
    %8 = vsyncpa [#allocation3], 0
    %9 = vsyncpa [#allocation4], 0
    // Predicated region
    $region2: #{tpu_custom_call.1} parent=1 // pred_check
      _
    $region3: #{tpu_custom_call.1} parent=1 // pred_check_branch
      %11 = sbr.rel (0) target = $region5
    $region4: #{tpu_custom_call.1} parent=1 // pred_region
      _
    $region5: #{tpu_custom_call.1} parent=1 // pred_fallthru
      _
    // Predicated region
    $region6: #{tpu_custom_call.1} parent=1 // pred_check
      _
    $region7: #{tpu_custom_call.1} parent=1 // pred_check_branch
      %13 = sbr.rel (0) target = $region9
    $region8: #{tpu_custom_call.1} parent=1 // pred_region
      %s15 = ssub.s32 1920, 1920
      %16 = vsyncadd [#allocation3], %s15
      %s17 = sshll.u32 [#allocation2], 4
      %s18 = int_to_ptr.vmem [resolvable:$true] %s17
      %23 = dma.hbm_to_vmem [thread:$0]  %s1, 1920, %s18, [#allocation3], 384, 384, 24
    $region9: #{tpu_custom_call.1} parent=1 // pred_fallthru
      _
    // Predicated region
    $region10: #{tpu_custom_call.1} parent=1 // pred_check
      _
    $region11: #{tpu_custom_call.1} parent=1 // pred_check_branch
      %25 = sbr.rel (0) target = $region13
    $region12: #{tpu_custom_call.1} parent=1 // pred_region
      _
    $region13: #{tpu_custom_call.1} parent=1 // pred_fallthru
      _
    // Predicated region
    $region14: #{tpu_custom_call.1} parent=1 // pred_check
      _
    $region15: #{tpu_custom_call.1} parent=1 // pred_check_branch
      %27 = sbr.rel (0) target = $region17
    $region16: #{tpu_custom_call.1} parent=1 // pred_region
      %28 = dma.done [#allocation3], 1920
    $region17: #{tpu_custom_call.1} parent=1 // pred_fallthru
      _
    %v29 = vld [vmem:[#allocation2] sm:$0xff]
    %v30 = vld [vmem:[#allocation2 + $0x18] sm:$0xff]
    %v31 = vld [vmem:[#allocation2 + $0x30] sm:$0xff]
    %v32 = vld [vmem:[#allocation2 + $0x48] sm:$0xff]
    %v33 = vld [vmem:[#allocation2 + $0x8] sm:$0xff]
    %v34 = vld [vmem:[#allocation2 + $0x20] sm:$0xff]
    %v35 = vld [vmem:[#allocation2 + $0x38] sm:$0xff]
    %v36 = vld [vmem:[#allocation2 + $0x50] sm:$0xff]
    %v37 = vld [vmem:[#allocation2 + $0x10] sm:$0xff]
    %v38 = vld [vmem:[#allocation2 + $0x28] sm:$0xff]
    %v39 = vld [vmem:[#allocation2 + $0x40] sm:$0xff]
    %v40 = vld [vmem:[#allocation2 + $0x58] sm:$0xff]
    %v41 = vld [vmem:[#allocation2 + $0x60] sm:$0xff]
    %v42 = vld [vmem:[%s0] sm:$0xff]
    %v43 = vld [vmem:[%s0 + $0x8] sm:$0xff]
    %vm44 = vcmask 261120
    %v45 = vsel %vm44, %v42, 0.0
    %46 = vadd.xlane.f32.xlu0 %v45
    %v47 = vpop.xlane.xlu0 %46
    %v48 = vsel %vm44, %v43, 0.0
    %49 = vadd.xlane.f32.xlu0 %v48
    %v50 = vpop.xlane.xlu0 %49
    %v51 = vrcp.pop 32.0
    %v52 = vmul.f32 %v47, %v51
    %v53 = vmul.f32 %v50, %v51
    %v54 = vsub.f32 %v42, %v52
    %v55 = vsub.f32 %v43, %v53
    %v56 = vmul.f32 %v54, %v54
    %v57 = vmul.f32 %v55, %v55
    %v58 = vsel %vm44, %v56, 0.0
    %59 = vadd.xlane.f32.xlu0 %v58
    %v60 = vpop.xlane.xlu0 %59
    %v61 = vsel %vm44, %v57, 0.0
    %62 = vadd.xlane.f32.xlu0 %v61
    %v63 = vpop.xlane.xlu0 %62
    %v64 = vmul.f32 %v60, %v51
    %v65 = vmul.f32 %v63, %v51
    %v66 = vadd.f32 %v64, 1e-05
    %v67 = vadd.f32 %v65, 1e-05
    %v68 = vrsqrt.pop %v66
    %v69 = vrsqrt.pop %v67
    %v70 = vmul.f32 %v54, %v68
    %v71 = vmul.f32 %v55, %v69
    %v72 = vlaneseq
    %v73 = vshrl.u32 %v72, 7
    %v74 = vsub.s32 0, %v73
    %v75 = vrot.slane %v41, %v74
    %v76 = vmul.f32 %v70, %v75
    %v77 = vmul.f32 %v71, %v75
    %v78 = vlaneseq
    %v79 = vshrl.u32 %v78, 7
    %v80 = vsub.s32 1, %v79
    %v81 = vrot.slane %v41, %v80
    %v82 = vadd.f32 %v76, %v81
    %v83 = vadd.f32 %v77, %v81
    %v84 = vlaneseq
    %v85 = vshrl.u32 %v84, 7
    %v86 = vsub.s32 7, %v85
    %v87 = vrot.slane %v41, %v86
    %v89 = vsel %vm44, %v82, 0
    %v92 = vsel %vm44, %v83, 0
    %94 = vmatprep.subr.mxu0 0.0
    %95 = vmatpush1.msra.mxu0 %v29
    %96 = vmatprep.subr.mxu0 0.0
    %97 = vmatpush1.msra.mxu0 %v30
    %98 = vmatprep.subr.mxu0 0.0
    %99 = vmatpush1.msra.mxu0 %v31
    %100 = vmatprep.subr.mxu0 0.0
    %101 = vmatpush1.msra.mxu0 %v32
    %102 = vmatprep.subr.mxu0 0.0
    %103 = vmatpush1.msra.mxu0 0.0
    %104 = vmatprep.subr.mxu0 0.0
    %105 = vmatpush1.msra.mxu0 0.0
    %106 = vmatprep.subr.mxu0 0.0
    %107 = vmatpush1.msra.mxu0 0.0
    %108 = vmatprep.subr.mxu0 0.0
    %109 = vmatpush1.msra.mxu0 0.0
    %110 = vmatprep.subr.mxu0 0.0
    %111 = vmatpush1.msra.mxu0 0.0
    %112 = vmatprep.subr.mxu0 0.0
    %113 = vmatpush1.msra.mxu0 0.0
    %114 = vmatprep.subr.mxu0 0.0
    %115 = vmatpush1.msra.mxu0 0.0
    %116 = vmatprep.subr.mxu0 0.0
    %117 = vmatpush1.msra.mxu0 0.0
    %118 = vmatprep.subr.mxu0 0.0
    %119 = vmatpush1.msra.mxu0 0.0
    %120 = vmatprep.subr.mxu0 0.0
    %121 = vmatpush1.msra.mxu0 0.0
    %122 = vmatprep.subr.mxu0 0.0
    %123 = vmatpush1.msra.mxu0 0.0
    %124 = vmatprep.subr.mxu0 0.0
    %125 = vmatpush1.msra.mxu0 0.0
    %126 = vmatprep.subr.mxu0 0.0
    %127 = vmatpush1.msra.mxu0 0.0
    %128 = vmatprep.subr.mxu0 0.0
    %129 = vmatpush1.msra.mxu0 0.0
    %130 = vmatprep.subr.mxu0 0.0
    %131 = vmatpush1.msra.mxu0 0.0
    %132 = vmatprep.subr.mxu0 0.0
    %133 = vmatpush1.msra.mxu0 0.0
    %134 = vmatprep.subr.mxu0 0.0
    %135 = vmatpush1.msra.mxu0 0.0
    %136 = vmatprep.subr.mxu0 0.0
    %137 = vmatpush1.msra.mxu0 0.0
    %138 = vmatprep.subr.mxu0 0.0
    %139 = vmatpush1.msra.mxu0 0.0
    %140 = vmatprep.subr.mxu0 0.0
    %141 = vmatpush1.msra.mxu0 0.0
    %142 = vmatprep.subr.mxu0 0.0
    %143 = vmatpush1.msra.mxu0 0.0
    %144 = vmatprep.subr.mxu0 0.0
    %145 = vmatpush1.msra.mxu0 0.0
    %146 = vmatprep.subr.mxu0 0.0
    %147 = vmatpush1.msra.mxu0 0.0
    %148 = vmatprep.subr.mxu0 0.0
    %149 = vmatpush1.msra.mxu0 0.0
    %150 = vmatprep.subr.mxu0 0.0
    %151 = vmatpush1.msra.mxu0 0.0
    %152 = vmatprep.subr.mxu0 0.0
    %153 = vmatpush1.msra.mxu0 0.0
    %154 = vmatprep.subr.mxu0 0.0
    %155 = vmatpush1.msra.mxu0 0.0
    %156 = vmatprep.subr.mxu0 0.0
    %157 = vmatpush1.msra.mxu0 0.0
    %158 = vmatprep.mubr.f32.mxu0 0.0
    %159 = vmatmul.mubr.f32.gmra.mrb[0].mxu0 %v89
    %v160 = vpop.f32.mrb[0].mxu0
    %v161 = vadd.f32 %v87, %v160
    %v162 = vpop.f32.mrb[0].mxu0
    %163 = vmatprep.mubr.f32.mxu0 0.0
    %164 = vmatmul.mubr.f32.gmra.mrb[0].mxu0 %v92
    %v165 = vpop.f32.mrb[0].mxu0
    %v166 = vadd.f32 %v87, %v165
    %v167 = vpop.f32.mrb[0].mxu0
    %168 = vdwg.mxu0
    %171 = vrot.lane.b32.xlu0 %v161, 120
    %v172 = vpop.permute.xlu0 %171
    %173 = vrot.lane.b32.xlu0 %v166, 120
    %v174 = vpop.permute.xlu0 %173
    %175 = vrot.lane.b32.xlu0 %v161, 112
    %v176 = vpop.permute.xlu0 %175
    %177 = vrot.lane.b32.xlu0 %v166, 112
    %v178 = vpop.permute.xlu0 %177
    %179 = vrot.lane.b32.xlu0 %v161, 104
    %v180 = vpop.permute.xlu0 %179
    %181 = vrot.lane.b32.xlu0 %v166, 104
    %v182 = vpop.permute.xlu0 %181
    %183 = vrot.lane.b32.xlu0 %v161, 96
    %v184 = vpop.permute.xlu0 %183
    %vm185 = vcmask 64512
    %v186 = vsel %vm185, %v161, 0
    %v188 = vsel %vm185, %v184, 0
    %190 = vmatprep.subr.mxu0 0.0
    %191 = vmatpush1.xpose.msra.mxu0 %v188
    %192 = vmatprep.subr.mxu0 0.0
    %193 = vmatpush1.xpose.msra.mxu0 0.0
    %194 = vmatprep.subr.mxu0 0.0
    %195 = vmatpush1.xpose.msra.mxu0 0.0
    %196 = vmatprep.subr.mxu0 0.0
    %197 = vmatpush1.xpose.msra.mxu0 0.0
    %198 = vmatprep.subr.mxu0 0.0
    %199 = vmatpush1.xpose.msra.mxu0 0.0
    %200 = vmatprep.subr.mxu0 0.0
    %201 = vmatpush1.xpose.msra.mxu0 0.0
    %202 = vmatprep.subr.mxu0 0.0
    %203 = vmatpush1.xpose.msra.mxu0 0.0
    %204 = vmatprep.subr.mxu0 0.0
    %205 = vmatpush1.xpose.msra.mxu0 0.0
    %206 = vmatprep.subr.mxu0 0.0
    %207 = vmatpush1.xpose.msra.mxu0 0.0
    %208 = vmatprep.subr.mxu0 0.0
    %209 = vmatpush1.xpose.msra.mxu0 0.0
    %210 = vmatprep.subr.mxu0 0.0
    %211 = vmatpush1.xpose.msra.mxu0 0.0
    %212 = vmatprep.subr.mxu0 0.0
    %213 = vmatpush1.xpose.msra.mxu0 0.0
    %214 = vmatprep.subr.mxu0 0.0
    %215 = vmatpush1.xpose.msra.mxu0 0.0
    %216 = vmatprep.subr.mxu0 0.0
    %217 = vmatpush1.xpose.msra.mxu0 0.0
    %218 = vmatprep.subr.mxu0 0.0
    %219 = vmatpush1.xpose.msra.mxu0 0.0
    %220 = vmatprep.subr.mxu0 0.0
    %221 = vmatpush1.xpose.msra.mxu0 0.0
    %222 = vmatprep.subr.mxu0 0.0
    %223 = vmatpush1.xpose.msra.mxu0 0.0
    %224 = vmatprep.subr.mxu0 0.0
    %225 = vmatpush1.xpose.msra.mxu0 0.0
    %226 = vmatprep.subr.mxu0 0.0
    %227 = vmatpush1.xpose.msra.mxu0 0.0
    %228 = vmatprep.subr.mxu0 0.0
    %229 = vmatpush1.xpose.msra.mxu0 0.0
    %230 = vmatprep.subr.mxu0 0.0
    %231 = vmatpush1.xpose.msra.mxu0 0.0
    %232 = vmatprep.subr.mxu0 0.0
    %233 = vmatpush1.xpose.msra.mxu0 0.0
    %234 = vmatprep.subr.mxu0 0.0
    %235 = vmatpush1.xpose.msra.mxu0 0.0
    %236 = vmatprep.subr.mxu0 0.0
    %237 = vmatpush1.xpose.msra.mxu0 0.0
    %238 = vmatprep.subr.mxu0 0.0
    %239 = vmatpush1.xpose.msra.mxu0 0.0
    %240 = vmatprep.subr.mxu0 0.0
    %241 = vmatpush1.xpose.msra.mxu0 0.0
    %242 = vmatprep.subr.mxu0 0.0
    %243 = vmatpush1.xpose.msra.mxu0 0.0
    %244 = vmatprep.subr.mxu0 0.0
    %245 = vmatpush1.xpose.msra.mxu0 0.0
    %246 = vmatprep.subr.mxu0 0.0
    %247 = vmatpush1.xpose.msra.mxu0 0.0
    %248 = vmatprep.subr.mxu0 0.0
    %249 = vmatpush1.xpose.msra.mxu0 0.0
    %250 = vmatprep.subr.mxu0 0.0
    %251 = vmatpush1.xpose.msra.mxu0 0.0
    %252 = vmatprep.subr.mxu0 0.0
    %253 = vmatpush1.xpose.msra.mxu0 0.0
    %254 = vmatprep.mubr.f32.mxu0 0.0
    %255 = vmatmul.mubr.f32.gmra.mrb[0].mxu0 %v186
    %v256 = vpop.f32.mrb[0].mxu0
    %v257 = vadd.f32 0.0, %v256
    %v258 = vpop.f32.mrb[0].mxu0
    %259 = vdwg.mxu0
    %260 = vrot.lane.b32.xlu0 %v166, 96
    %v261 = vpop.permute.xlu0 %260
    %v262 = vsel %vm185, %v166, 0
    %v264 = vsel %vm185, %v261, 0
    %266 = vmatprep.subr.mxu0 0.0
    %267 = vmatpush1.xpose.msra.mxu0 %v264
    %268 = vmatprep.subr.mxu0 0.0
    %269 = vmatpush1.xpose.msra.mxu0 0.0
    %270 = vmatprep.subr.mxu0 0.0
    %271 = vmatpush1.xpose.msra.mxu0 0.0
    %272 = vmatprep.subr.mxu0 0.0
    %273 = vmatpush1.xpose.msra.mxu0 0.0
    %274 = vmatprep.subr.mxu0 0.0
    %275 = vmatpush1.xpose.msra.mxu0 0.0
    %276 = vmatprep.subr.mxu0 0.0
    %277 = vmatpush1.xpose.msra.mxu0 0.0
    %278 = vmatprep.subr.mxu0 0.0
    %279 = vmatpush1.xpose.msra.mxu0 0.0
    %280 = vmatprep.subr.mxu0 0.0
    %281 = vmatpush1.xpose.msra.mxu0 0.0
    %282 = vmatprep.subr.mxu0 0.0
    %283 = vmatpush1.xpose.msra.mxu0 0.0
    %284 = vmatprep.subr.mxu0 0.0
    %285 = vmatpush1.xpose.msra.mxu0 0.0
    %286 = vmatprep.subr.mxu0 0.0
    %287 = vmatpush1.xpose.msra.mxu0 0.0
    %288 = vmatprep.subr.mxu0 0.0
    %289 = vmatpush1.xpose.msra.mxu0 0.0
    %290 = vmatprep.subr.mxu0 0.0
    %291 = vmatpush1.xpose.msra.mxu0 0.0
    %292 = vmatprep.subr.mxu0 0.0
    %293 = vmatpush1.xpose.msra.mxu0 0.0
    %294 = vmatprep.subr.mxu0 0.0
    %295 = vmatpush1.xpose.msra.mxu0 0.0
    %296 = vmatprep.subr.mxu0 0.0
    %297 = vmatpush1.xpose.msra.mxu0 0.0
    %298 = vmatprep.subr.mxu0 0.0
    %299 = vmatpush1.xpose.msra.mxu0 0.0
    %300 = vmatprep.subr.mxu0 0.0
    %301 = vmatpush1.xpose.msra.mxu0 0.0
    %302 = vmatprep.subr.mxu0 0.0
    %303 = vmatpush1.xpose.msra.mxu0 0.0
    %304 = vmatprep.subr.mxu0 0.0
    %305 = vmatpush1.xpose.msra.mxu0 0.0
    %306 = vmatprep.subr.mxu0 0.0
    %307 = vmatpush1.xpose.msra.mxu0 0.0
    %308 = vmatprep.subr.mxu0 0.0
    %309 = vmatpush1.xpose.msra.mxu0 0.0
    %310 = vmatprep.subr.mxu0 0.0
    %311 = vmatpush1.xpose.msra.mxu0 0.0
    %312 = vmatprep.subr.mxu0 0.0
    %313 = vmatpush1.xpose.msra.mxu0 0.0
    %314 = vmatprep.subr.mxu0 0.0
    %315 = vmatpush1.xpose.msra.mxu0 0.0
    %316 = vmatprep.subr.mxu0 0.0
    %317 = vmatpush1.xpose.msra.mxu0 0.0
    %318 = vmatprep.subr.mxu0 0.0
    %319 = vmatpush1.xpose.msra.mxu0 0.0
    %320 = vmatprep.subr.mxu0 0.0
    %321 = vmatpush1.xpose.msra.mxu0 0.0
    %322 = vmatprep.subr.mxu0 0.0
    %323 = vmatpush1.xpose.msra.mxu0 0.0
    %324 = vmatprep.subr.mxu0 0.0
    %325 = vmatpush1.xpose.msra.mxu0 0.0
    %326 = vmatprep.subr.mxu0 0.0
    %327 = vmatpush1.xpose.msra.mxu0 0.0
    %328 = vmatprep.subr.mxu0 0.0
    %329 = vmatpush1.xpose.msra.mxu0 0.0
    %330 = vmatprep.mubr.f32.mxu0 0.0
    %331 = vmatmul.mubr.f32.gmra.mrb[0].mxu0 %v262
    %v332 = vpop.f32.mrb[0].mxu0
    %v333 = vadd.f32 0.0, %v332
    %v334 = vpop.f32.mrb[0].mxu0
    %335 = vdwg.mxu0
    %336 = vrot.lane.b32.xlu0 %v172, 96
    %v337 = vpop.permute.xlu0 %336
    %v338 = vsel %vm185, %v172, 0
    %v340 = vsel %vm185, %v337, 0
    %342 = vmatprep.subr.mxu0 0.0
    %343 = vmatpush1.xpose.msra.mxu0 %v340
    %344 = vmatprep.subr.mxu0 0.0
    %345 = vmatpush1.xpose.msra.mxu0 0.0
    %346 = vmatprep.subr.mxu0 0.0
    %347 = vmatpush1.xpose.msra.mxu0 0.0
    %348 = vmatprep.subr.mxu0 0.0
    %349 = vmatpush1.xpose.msra.mxu0 0.0
    %350 = vmatprep.subr.mxu0 0.0
    %351 = vmatpush1.xpose.msra.mxu0 0.0
    %352 = vmatprep.subr.mxu0 0.0
    %353 = vmatpush1.xpose.msra.mxu0 0.0
    %354 = vmatprep.subr.mxu0 0.0
    %355 = vmatpush1.xpose.msra.mxu0 0.0
    %356 = vmatprep.subr.mxu0 0.0
    %357 = vmatpush1.xpose.msra.mxu0 0.0
    %358 = vmatprep.subr.mxu0 0.0
    %359 = vmatpush1.xpose.msra.mxu0 0.0
    %360 = vmatprep.subr.mxu0 0.0
    %361 = vmatpush1.xpose.msra.mxu0 0.0
    %362 = vmatprep.subr.mxu0 0.0
    %363 = vmatpush1.xpose.msra.mxu0 0.0
    %364 = vmatprep.subr.mxu0 0.0
    %365 = vmatpush1.xpose.msra.mxu0 0.0
    %366 = vmatprep.subr.mxu0 0.0
    %367 = vmatpush1.xpose.msra.mxu0 0.0
    %368 = vmatprep.subr.mxu0 0.0
    %369 = vmatpush1.xpose.msra.mxu0 0.0
    %370 = vmatprep.subr.mxu0 0.0
    %371 = vmatpush1.xpose.msra.mxu0 0.0
    %372 = vmatprep.subr.mxu0 0.0
    %373 = vmatpush1.xpose.msra.mxu0 0.0
    %374 = vmatprep.subr.mxu0 0.0
    %375 = vmatpush1.xpose.msra.mxu0 0.0
    %376 = vmatprep.subr.mxu0 0.0
    %377 = vmatpush1.xpose.msra.mxu0 0.0
    %378 = vmatprep.subr.mxu0 0.0
    %379 = vmatpush1.xpose.msra.mxu0 0.0
    %380 = vmatprep.subr.mxu0 0.0
    %381 = vmatpush1.xpose.msra.mxu0 0.0
    %382 = vmatprep.subr.mxu0 0.0
    %383 = vmatpush1.xpose.msra.mxu0 0.0
    %384 = vmatprep.subr.mxu0 0.0
    %385 = vmatpush1.xpose.msra.mxu0 0.0
    %386 = vmatprep.subr.mxu0 0.0
    %387 = vmatpush1.xpose.msra.mxu0 0.0
    %388 = vmatprep.subr.mxu0 0.0
    %389 = vmatpush1.xpose.msra.mxu0 0.0
    %390 = vmatprep.subr.mxu0 0.0
    %391 = vmatpush1.xpose.msra.mxu0 0.0
    %392 = vmatprep.subr.mxu0 0.0
    %393 = vmatpush1.xpose.msra.mxu0 0.0
    %394 = vmatprep.subr.mxu0 0.0
    %395 = vmatpush1.xpose.msra.mxu0 0.0
    %396 = vmatprep.subr.mxu0 0.0
    %397 = vmatpush1.xpose.msra.mxu0 0.0
    %398 = vmatprep.subr.mxu0 0.0
    %399 = vmatpush1.xpose.msra.mxu0 0.0
    %400 = vmatprep.subr.mxu0 0.0
    %401 = vmatpush1.xpose.msra.mxu0 0.0
    %402 = vmatprep.subr.mxu0 0.0
    %403 = vmatpush1.xpose.msra.mxu0 0.0
    %404 = vmatprep.subr.mxu0 0.0
    %405 = vmatpush1.xpose.msra.mxu0 0.0
    %406 = vmatprep.mubr.f32.mxu0 0.0
    %407 = vmatmul.mubr.f32.gmra.mrb[0].mxu0 %v338
    %v408 = vpop.f32.mrb[0].mxu0
    %v409 = vadd.f32 0.0, %v408
    %v410 = vpop.f32.mrb[0].mxu0
    %411 = vdwg.mxu0
    %412 = vrot.lane.b32.xlu0 %v174, 96
    %v413 = vpop.permute.xlu0 %412
    %v414 = vsel %vm185, %v174, 0
    %v416 = vsel %vm185, %v413, 0
    %418 = vmatprep.subr.mxu0 0.0
    %419 = vmatpush1.xpose.msra.mxu0 %v416
    %420 = vmatprep.subr.mxu0 0.0
    %421 = vmatpush1.xpose.msra.mxu0 0.0
    %422 = vmatprep.subr.mxu0 0.0
    %423 = vmatpush1.xpose.msra.mxu0 0.0
    %424 = vmatprep.subr.mxu0 0.0
    %425 = vmatpush1.xpose.msra.mxu0 0.0
    %426 = vmatprep.subr.mxu0 0.0
    %427 = vmatpush1.xpose.msra.mxu0 0.0
    %428 = vmatprep.subr.mxu0 0.0
    %429 = vmatpush1.xpose.msra.mxu0 0.0
    %430 = vmatprep.subr.mxu0 0.0
    %431 = vmatpush1.xpose.msra.mxu0 0.0
    %432 = vmatprep.subr.mxu0 0.0
    %433 = vmatpush1.xpose.msra.mxu0 0.0
    %434 = vmatprep.subr.mxu0 0.0
    %435 = vmatpush1.xpose.msra.mxu0 0.0
    %436 = vmatprep.subr.mxu0 0.0
    %437 = vmatpush1.xpose.msra.mxu0 0.0
    %438 = vmatprep.subr.mxu0 0.0
    %439 = vmatpush1.xpose.msra.mxu0 0.0
    %440 = vmatprep.subr.mxu0 0.0
    %441 = vmatpush1.xpose.msra.mxu0 0.0
    %442 = vmatprep.subr.mxu0 0.0
    %443 = vmatpush1.xpose.msra.mxu0 0.0
    %444 = vmatprep.subr.mxu0 0.0
    %445 = vmatpush1.xpose.msra.mxu0 0.0
    %446 = vmatprep.subr.mxu0 0.0
    %447 = vmatpush1.xpose.msra.mxu0 0.0
    %448 = vmatprep.subr.mxu0 0.0
    %449 = vmatpush1.xpose.msra.mxu0 0.0
    %450 = vmatprep.subr.mxu0 0.0
    %451 = vmatpush1.xpose.msra.mxu0 0.0
    %452 = vmatprep.subr.mxu0 0.0
    %453 = vmatpush1.xpose.msra.mxu0 0.0
    %454 = vmatprep.subr.mxu0 0.0
    %455 = vmatpush1.xpose.msra.mxu0 0.0
    %456 = vmatprep.subr.mxu0 0.0
    %457 = vmatpush1.xpose.msra.mxu0 0.0
    %458 = vmatprep.subr.mxu0 0.0
    %459 = vmatpush1.xpose.msra.mxu0 0.0
    %460 = vmatprep.subr.mxu0 0.0
    %461 = vmatpush1.xpose.msra.mxu0 0.0
    %462 = vmatprep.subr.mxu0 0.0
    %463 = vmatpush1.xpose.msra.mxu0 0.0
    %464 = vmatprep.subr.mxu0 0.0
    %465 = vmatpush1.xpose.msra.mxu0 0.0
    %466 = vmatprep.subr.mxu0 0.0
    %467 = vmatpush1.xpose.msra.mxu0 0.0
    %468 = vmatprep.subr.mxu0 0.0
    %469 = vmatpush1.xpose.msra.mxu0 0.0
    %470 = vmatprep.subr.mxu0 0.0
    %471 = vmatpush1.xpose.msra.mxu0 0.0
    %472 = vmatprep.subr.mxu0 0.0
    %473 = vmatpush1.xpose.msra.mxu0 0.0
    %474 = vmatprep.subr.mxu0 0.0
    %475 = vmatpush1.xpose.msra.mxu0 0.0
    %476 = vmatprep.subr.mxu0 0.0
    %477 = vmatpush1.xpose.msra.mxu0 0.0
    %478 = vmatprep.subr.mxu0 0.0
    %479 = vmatpush1.xpose.msra.mxu0 0.0
    %480 = vmatprep.subr.mxu0 0.0
    %481 = vmatpush1.xpose.msra.mxu0 0.0
    %482 = vmatprep.mubr.f32.mxu0 0.0
    %483 = vmatmul.mubr.f32.gmra.mrb[0].mxu0 %v414
    %v484 = vpop.f32.mrb[0].mxu0
    %v485 = vadd.f32 0.0, %v484
    %v486 = vpop.f32.mrb[0].mxu0
    %487 = vdwg.mxu0
    %488 = vrot.lane.b32.xlu0 %v176, 96
    %v489 = vpop.permute.xlu0 %488
    %v490 = vsel %vm185, %v176, 0
    %v492 = vsel %vm185, %v489, 0
    %494 = vmatprep.subr.mxu0 0.0
    %495 = vmatpush1.xpose.msra.mxu0 %v492
    %496 = vmatprep.subr.mxu0 0.0
    %497 = vmatpush1.xpose.msra.mxu0 0.0
    %498 = vmatprep.subr.mxu0 0.0
    %499 = vmatpush1.xpose.msra.mxu0 0.0
    %500 = vmatprep.subr.mxu0 0.0
    %501 = vmatpush1.xpose.msra.mxu0 0.0
    %502 = vmatprep.subr.mxu0 0.0
    %503 = vmatpush1.xpose.msra.mxu0 0.0
    %504 = vmatprep.subr.mxu0 0.0
    %505 = vmatpush1.xpose.msra.mxu0 0.0
    %506 = vmatprep.subr.mxu0 0.0
    %507 = vmatpush1.xpose.msra.mxu0 0.0
    %508 = vmatprep.subr.mxu0 0.0
    %509 = vmatpush1.xpose.msra.mxu0 0.0
    %510 = vmatprep.subr.mxu0 0.0
    %511 = vmatpush1.xpose.msra.mxu0 0.0
    %512 = vmatprep.subr.mxu0 0.0
    %513 = vmatpush1.xpose.msra.mxu0 0.0
    %514 = vmatprep.subr.mxu0 0.0
    %515 = vmatpush1.xpose.msra.mxu0 0.0
    %516 = vmatprep.subr.mxu0 0.0
    %517 = vmatpush1.xpose.msra.mxu0 0.0
    %518 = vmatprep.subr.mxu0 0.0
    %519 = vmatpush1.xpose.msra.mxu0 0.0
    %520 = vmatprep.subr.mxu0 0.0
    %521 = vmatpush1.xpose.msra.mxu0 0.0
    %522 = vmatprep.subr.mxu0 0.0
    %523 = vmatpush1.xpose.msra.mxu0 0.0
    %524 = vmatprep.subr.mxu0 0.0
    %525 = vmatpush1.xpose.msra.mxu0 0.0
    %526 = vmatprep.subr.mxu0 0.0
    %527 = vmatpush1.xpose.msra.mxu0 0.0
    %528 = vmatprep.subr.mxu0 0.0
    %529 = vmatpush1.xpose.msra.mxu0 0.0
    %530 = vmatprep.subr.mxu0 0.0
    %531 = vmatpush1.xpose.msra.mxu0 0.0
    %532 = vmatprep.subr.mxu0 0.0
    %533 = vmatpush1.xpose.msra.mxu0 0.0
    %534 = vmatprep.subr.mxu0 0.0
    %535 = vmatpush1.xpose.msra.mxu0 0.0
    %536 = vmatprep.subr.mxu0 0.0
    %537 = vmatpush1.xpose.msra.mxu0 0.0
    %538 = vmatprep.subr.mxu0 0.0
    %539 = vmatpush1.xpose.msra.mxu0 0.0
    %540 = vmatprep.subr.mxu0 0.0
    %541 = vmatpush1.xpose.msra.mxu0 0.0
    %542 = vmatprep.subr.mxu0 0.0
    %543 = vmatpush1.xpose.msra.mxu0 0.0
    %544 = vmatprep.subr.mxu0 0.0
    %545 = vmatpush1.xpose.msra.mxu0 0.0
    %546 = vmatprep.subr.mxu0 0.0
    %547 = vmatpush1.xpose.msra.mxu0 0.0
    %548 = vmatprep.subr.mxu0 0.0
    %549 = vmatpush1.xpose.msra.mxu0 0.0
    %550 = vmatprep.subr.mxu0 0.0
    %551 = vmatpush1.xpose.msra.mxu0 0.0
    %552 = vmatprep.subr.mxu0 0.0
    %553 = vmatpush1.xpose.msra.mxu0 0.0
    %554 = vmatprep.subr.mxu0 0.0
    %555 = vmatpush1.xpose.msra.mxu0 0.0
    %556 = vmatprep.subr.mxu0 0.0
    %557 = vmatpush1.xpose.msra.mxu0 0.0
    %558 = vmatprep.mubr.f32.mxu0 0.0
    %559 = vmatmul.mubr.f32.gmra.mrb[0].mxu0 %v490
    %v560 = vpop.f32.mrb[0].mxu0
    %v561 = vadd.f32 0.0, %v560
    %v562 = vpop.f32.mrb[0].mxu0
    %563 = vdwg.mxu0
    %564 = vrot.lane.b32.xlu0 %v178, 96
    %v565 = vpop.permute.xlu0 %564
    %v566 = vsel %vm185, %v178, 0
    %v568 = vsel %vm185, %v565, 0
    %570 = vmatprep.subr.mxu0 0.0
    %571 = vmatpush1.xpose.msra.mxu0 %v568
    %572 = vmatprep.subr.mxu0 0.0
    %573 = vmatpush1.xpose.msra.mxu0 0.0
    %574 = vmatprep.subr.mxu0 0.0
    %575 = vmatpush1.xpose.msra.mxu0 0.0
    %576 = vmatprep.subr.mxu0 0.0
    %577 = vmatpush1.xpose.msra.mxu0 0.0
    %578 = vmatprep.subr.mxu0 0.0
    %579 = vmatpush1.xpose.msra.mxu0 0.0
    %580 = vmatprep.subr.mxu0 0.0
    %581 = vmatpush1.xpose.msra.mxu0 0.0
    %582 = vmatprep.subr.mxu0 0.0
    %583 = vmatpush1.xpose.msra.mxu0 0.0
    %584 = vmatprep.subr.mxu0 0.0
    %585 = vmatpush1.xpose.msra.mxu0 0.0
    %586 = vmatprep.subr.mxu0 0.0
    %587 = vmatpush1.xpose.msra.mxu0 0.0
    %588 = vmatprep.subr.mxu0 0.0
    %589 = vmatpush1.xpose.msra.mxu0 0.0
    %590 = vmatprep.subr.mxu0 0.0
    %591 = vmatpush1.xpose.msra.mxu0 0.0
    %592 = vmatprep.subr.mxu0 0.0
    %593 = vmatpush1.xpose.msra.mxu0 0.0
    %594 = vmatprep.subr.mxu0 0.0
    %595 = vmatpush1.xpose.msra.mxu0 0.0
    %596 = vmatprep.subr.mxu0 0.0
    %597 = vmatpush1.xpose.msra.mxu0 0.0
    %598 = vmatprep.subr.mxu0 0.0
    %599 = vmatpush1.xpose.msra.mxu0 0.0
    %600 = vmatprep.subr.mxu0 0.0
    %601 = vmatpush1.xpose.msra.mxu0 0.0
    %602 = vmatprep.subr.mxu0 0.0
    %603 = vmatpush1.xpose.msra.mxu0 0.0
    %604 = vmatprep.subr.mxu0 0.0
    %605 = vmatpush1.xpose.msra.mxu0 0.0
    %606 = vmatprep.subr.mxu0 0.0
    %607 = vmatpush1.xpose.msra.mxu0 0.0
    %608 = vmatprep.subr.mxu0 0.0
    %609 = vmatpush1.xpose.msra.mxu0 0.0
    %610 = vmatprep.subr.mxu0 0.0
    %611 = vmatpush1.xpose.msra.mxu0 0.0
    %612 = vmatprep.subr.mxu0 0.0
    %613 = vmatpush1.xpose.msra.mxu0 0.0
    %614 = vmatprep.subr.mxu0 0.0
    %615 = vmatpush1.xpose.msra.mxu0 0.0
    %616 = vmatprep.subr.mxu0 0.0
    %617 = vmatpush1.xpose.msra.mxu0 0.0
    %618 = vmatprep.subr.mxu0 0.0
    %619 = vmatpush1.xpose.msra.mxu0 0.0
    %620 = vmatprep.subr.mxu0 0.0
    %621 = vmatpush1.xpose.msra.mxu0 0.0
    %622 = vmatprep.subr.mxu0 0.0
    %623 = vmatpush1.xpose.msra.mxu0 0.0
    %624 = vmatprep.subr.mxu0 0.0
    %625 = vmatpush1.xpose.msra.mxu0 0.0
    %626 = vmatprep.subr.mxu0 0.0
    %627 = vmatpush1.xpose.msra.mxu0 0.0
    %628 = vmatprep.subr.mxu0 0.0
    %629 = vmatpush1.xpose.msra.mxu0 0.0
    %630 = vmatprep.subr.mxu0 0.0
    %631 = vmatpush1.xpose.msra.mxu0 0.0
    %632 = vmatprep.subr.mxu0 0.0
    %633 = vmatpush1.xpose.msra.mxu0 0.0
    %634 = vmatprep.mubr.f32.mxu0 0.0
    %635 = vmatmul.mubr.f32.gmra.mrb[0].mxu0 %v566
    %v636 = vpop.f32.mrb[0].mxu0
    %v637 = vadd.f32 0.0, %v636
    %v638 = vpop.f32.mrb[0].mxu0
    %639 = vdwg.mxu0
    %640 = vrot.lane.b32.xlu0 %v180, 96
    %v641 = vpop.permute.xlu0 %640
    %v642 = vsel %vm185, %v180, 0
    %v644 = vsel %vm185, %v641, 0
    %646 = vmatprep.subr.mxu0 0.0
    %647 = vmatpush1.xpose.msra.mxu0 %v644
    %648 = vmatprep.subr.mxu0 0.0
    %649 = vmatpush1.xpose.msra.mxu0 0.0
    %650 = vmatprep.subr.mxu0 0.0
    %651 = vmatpush1.xpose.msra.mxu0 0.0
    %652 = vmatprep.subr.mxu0 0.0
    %653 = vmatpush1.xpose.msra.mxu0 0.0
    %654 = vmatprep.subr.mxu0 0.0
    %655 = vmatpush1.xpose.msra.mxu0 0.0
    %656 = vmatprep.subr.mxu0 0.0
    %657 = vmatpush1.xpose.msra.mxu0 0.0
    %658 = vmatprep.subr.mxu0 0.0
    %659 = vmatpush1.xpose.msra.mxu0 0.0
    %660 = vmatprep.subr.mxu0 0.0
    %661 = vmatpush1.xpose.msra.mxu0 0.0
    %662 = vmatprep.subr.mxu0 0.0
    %663 = vmatpush1.xpose.msra.mxu0 0.0
    %664 = vmatprep.subr.mxu0 0.0
    %665 = vmatpush1.xpose.msra.mxu0 0.0
    %666 = vmatprep.subr.mxu0 0.0
    %667 = vmatpush1.xpose.msra.mxu0 0.0
    %668 = vmatprep.subr.mxu0 0.0
    %669 = vmatpush1.xpose.msra.mxu0 0.0
    %670 = vmatprep.subr.mxu0 0.0
    %671 = vmatpush1.xpose.msra.mxu0 0.0
    %672 = vmatprep.subr.mxu0 0.0
    %673 = vmatpush1.xpose.msra.mxu0 0.0
    %674 = vmatprep.subr.mxu0 0.0
    %675 = vmatpush1.xpose.msra.mxu0 0.0
    %676 = vmatprep.subr.mxu0 0.0
    %677 = vmatpush1.xpose.msra.mxu0 0.0
    %678 = vmatprep.subr.mxu0 0.0
    %679 = vmatpush1.xpose.msra.mxu0 0.0
    %680 = vmatprep.subr.mxu0 0.0
    %681 = vmatpush1.xpose.msra.mxu0 0.0
    %682 = vmatprep.subr.mxu0 0.0
    %683 = vmatpush1.xpose.msra.mxu0 0.0
    %684 = vmatprep.subr.mxu0 0.0
    %685 = vmatpush1.xpose.msra.mxu0 0.0
    %686 = vmatprep.subr.mxu0 0.0
    %687 = vmatpush1.xpose.msra.mxu0 0.0
    %688 = vmatprep.subr.mxu0 0.0
    %689 = vmatpush1.xpose.msra.mxu0 0.0
    %690 = vmatprep.subr.mxu0 0.0
    %691 = vmatpush1.xpose.msra.mxu0 0.0
    %692 = vmatprep.subr.mxu0 0.0
    %693 = vmatpush1.xpose.msra.mxu0 0.0
    %694 = vmatprep.subr.mxu0 0.0
    %695 = vmatpush1.xpose.msra.mxu0 0.0
    %696 = vmatprep.subr.mxu0 0.0
    %697 = vmatpush1.xpose.msra.mxu0 0.0
    %698 = vmatprep.subr.mxu0 0.0
    %699 = vmatpush1.xpose.msra.mxu0 0.0
    %700 = vmatprep.subr.mxu0 0.0
    %701 = vmatpush1.xpose.msra.mxu0 0.0
    %702 = vmatprep.subr.mxu0 0.0
    %703 = vmatpush1.xpose.msra.mxu0 0.0
    %704 = vmatprep.subr.mxu0 0.0
    %705 = vmatpush1.xpose.msra.mxu0 0.0
    %706 = vmatprep.subr.mxu0 0.0
    %707 = vmatpush1.xpose.msra.mxu0 0.0
    %708 = vmatprep.subr.mxu0 0.0
    %709 = vmatpush1.xpose.msra.mxu0 0.0
    %710 = vmatprep.mubr.f32.mxu0 0.0
    %711 = vmatmul.mubr.f32.gmra.mrb[0].mxu0 %v642
    %v712 = vpop.f32.mrb[0].mxu0
    %v713 = vadd.f32 0.0, %v712
    %v714 = vpop.f32.mrb[0].mxu0
    %715 = vdwg.mxu0
    %716 = vrot.lane.b32.xlu0 %v182, 96
    %v717 = vpop.permute.xlu0 %716
    %v718 = vsel %vm185, %v182, 0
    %v720 = vsel %vm185, %v717, 0
    %722 = vmatprep.subr.mxu0 0.0
    %723 = vmatpush1.xpose.msra.mxu0 %v720
    %724 = vmatprep.subr.mxu0 0.0
    %725 = vmatpush1.xpose.msra.mxu0 0.0
    %726 = vmatprep.subr.mxu0 0.0
    %727 = vmatpush1.xpose.msra.mxu0 0.0
    %728 = vmatprep.subr.mxu0 0.0
    %729 = vmatpush1.xpose.msra.mxu0 0.0
    %730 = vmatprep.subr.mxu0 0.0
    %731 = vmatpush1.xpose.msra.mxu0 0.0
    %732 = vmatprep.subr.mxu0 0.0
    %733 = vmatpush1.xpose.msra.mxu0 0.0
    %734 = vmatprep.subr.mxu0 0.0
    %735 = vmatpush1.xpose.msra.mxu0 0.0
    %736 = vmatprep.subr.mxu0 0.0
    %737 = vmatpush1.xpose.msra.mxu0 0.0
    %738 = vmatprep.subr.mxu0 0.0
    %739 = vmatpush1.xpose.msra.mxu0 0.0
    %740 = vmatprep.subr.mxu0 0.0
    %741 = vmatpush1.xpose.msra.mxu0 0.0
    %742 = vmatprep.subr.mxu0 0.0
    %743 = vmatpush1.xpose.msra.mxu0 0.0
    %744 = vmatprep.subr.mxu0 0.0
    %745 = vmatpush1.xpose.msra.mxu0 0.0
    %746 = vmatprep.subr.mxu0 0.0
    %747 = vmatpush1.xpose.msra.mxu0 0.0
    %748 = vmatprep.subr.mxu0 0.0
    %749 = vmatpush1.xpose.msra.mxu0 0.0
    %750 = vmatprep.subr.mxu0 0.0
    %751 = vmatpush1.xpose.msra.mxu0 0.0
    %752 = vmatprep.subr.mxu0 0.0
    %753 = vmatpush1.xpose.msra.mxu0 0.0
    %754 = vmatprep.subr.mxu0 0.0
    %755 = vmatpush1.xpose.msra.mxu0 0.0
    %756 = vmatprep.subr.mxu0 0.0
    %757 = vmatpush1.xpose.msra.mxu0 0.0
    %758 = vmatprep.subr.mxu0 0.0
    %759 = vmatpush1.xpose.msra.mxu0 0.0
    %760 = vmatprep.subr.mxu0 0.0
    %761 = vmatpush1.xpose.msra.mxu0 0.0
    %762 = vmatprep.subr.mxu0 0.0
    %763 = vmatpush1.xpose.msra.mxu0 0.0
    %764 = vmatprep.subr.mxu0 0.0
    %765 = vmatpush1.xpose.msra.mxu0 0.0
    %766 = vmatprep.subr.mxu0 0.0
    %767 = vmatpush1.xpose.msra.mxu0 0.0
    %768 = vmatprep.subr.mxu0 0.0
    %769 = vmatpush1.xpose.msra.mxu0 0.0
    %770 = vmatprep.subr.mxu0 0.0
    %771 = vmatpush1.xpose.msra.mxu0 0.0
    %772 = vmatprep.subr.mxu0 0.0
    %773 = vmatpush1.xpose.msra.mxu0 0.0
    %774 = vmatprep.subr.mxu0 0.0
    %775 = vmatpush1.xpose.msra.mxu0 0.0
    %776 = vmatprep.subr.mxu0 0.0
    %777 = vmatpush1.xpose.msra.mxu0 0.0
    %778 = vmatprep.subr.mxu0 0.0
    %779 = vmatpush1.xpose.msra.mxu0 0.0
    %780 = vmatprep.subr.mxu0 0.0
    %781 = vmatpush1.xpose.msra.mxu0 0.0
    %782 = vmatprep.subr.mxu0 0.0
    %783 = vmatpush1.xpose.msra.mxu0 0.0
    %784 = vmatprep.subr.mxu0 0.0
    %785 = vmatpush1.xpose.msra.mxu0 0.0
    %786 = vmatprep.mubr.f32.mxu0 0.0
    %787 = vmatmul.mubr.f32.gmra.mrb[0].mxu0 %v718
    %v788 = vpop.f32.mrb[0].mxu0
    %v789 = vadd.f32 0.0, %v788
    %v790 = vpop.f32.mrb[0].mxu0
    %791 = vdwg.mxu0
    %v792 = vsel %vm185, %v257, -inf
    %793 = vmax.xlane.f32.xlu0 %v792
    %v794 = vpop.xlane.xlu0 %793
    %v795 = vsel %vm185, %v333, -inf
    %796 = vmax.xlane.f32.xlu0 %v795
    %v797 = vpop.xlane.xlu0 %796
    %v798 = vsel %vm185, %v409, -inf
    %799 = vmax.xlane.f32.xlu0 %v798
    %v800 = vpop.xlane.xlu0 %799
    %v801 = vsel %vm185, %v485, -inf
    %802 = vmax.xlane.f32.xlu0 %v801
    %v803 = vpop.xlane.xlu0 %802
    %v804 = vsel %vm185, %v561, -inf
    %805 = vmax.xlane.f32.xlu0 %v804
    %v806 = vpop.xlane.xlu0 %805
    %v807 = vsel %vm185, %v637, -inf
    %808 = vmax.xlane.f32.xlu0 %v807
    %v809 = vpop.xlane.xlu0 %808
    %v810 = vsel %vm185, %v713, -inf
    %811 = vmax.xlane.f32.xlu0 %v810
    %v812 = vpop.xlane.xlu0 %811
    %v813 = vsel %vm185, %v789, -inf
    %814 = vmax.xlane.f32.xlu0 %v813
    %v815 = vpop.xlane.xlu0 %814
    %v816 = vsub.f32 %v257, %v794
    %v817 = vsub.f32 %v333, %v797
    %v818 = vsub.f32 %v409, %v800
    %v819 = vsub.f32 %v485, %v803
    %v820 = vsub.f32 %v561, %v806
    %v821 = vsub.f32 %v637, %v809
    %v822 = vsub.f32 %v713, %v812
    %v823 = vsub.f32 %v789, %v815
    %v824 = vmul.f32 %v816, 1.442695
    %v825 = vpow.pop %v824
    %v826 = vmul.f32 %v817, 1.442695
    %v827 = vpow.pop %v826
    %v828 = vmul.f32 %v818, 1.442695
    %v829 = vpow.pop %v828
    %v830 = vmul.f32 %v819, 1.442695
    %v831 = vpow.pop %v830
    %v832 = vmul.f32 %v820, 1.442695
    %v833 = vpow.pop %v832
    %v834 = vmul.f32 %v821, 1.442695
    %v835 = vpow.pop %v834
    %v836 = vmul.f32 %v822, 1.442695
    %v837 = vpow.pop %v836
    %v838 = vmul.f32 %v823, 1.442695
    %v839 = vpow.pop %v838
    %v840 = vsel %vm185, %v825, 0.0
    %841 = vadd.xlane.f32.xlu0 %v840
    %v842 = vpop.xlane.xlu0 %841
    %v843 = vsel %vm185, %v827, 0.0
    %844 = vadd.xlane.f32.xlu0 %v843
    %v845 = vpop.xlane.xlu0 %844
    %v846 = vsel %vm185, %v829, 0.0
    %847 = vadd.xlane.f32.xlu0 %v846
    %v848 = vpop.xlane.xlu0 %847
    %v849 = vsel %vm185, %v831, 0.0
    %850 = vadd.xlane.f32.xlu0 %v849
    %v851 = vpop.xlane.xlu0 %850
    %v852 = vsel %vm185, %v833, 0.0
    %853 = vadd.xlane.f32.xlu0 %v852
    %v854 = vpop.xlane.xlu0 %853
    %v855 = vsel %vm185, %v835, 0.0
    %856 = vadd.xlane.f32.xlu0 %v855
    %v857 = vpop.xlane.xlu0 %856
    %v858 = vsel %vm185, %v837, 0.0
    %859 = vadd.xlane.f32.xlu0 %v858
    %v860 = vpop.xlane.xlu0 %859
    %v861 = vsel %vm185, %v839, 0.0
    %862 = vadd.xlane.f32.xlu0 %v861
    %v863 = vpop.xlane.xlu0 %862
    %v864 = vrcp.pop %v842
    %v865 = vrcp.pop %v845
    %v866 = vrcp.pop %v848
    %v867 = vrcp.pop %v851
    %v868 = vrcp.pop %v854
    %v869 = vrcp.pop %v857
    %v870 = vrcp.pop %v860
    %v871 = vrcp.pop %v863
    %v872 = vmul.f32 %v825, %v864
    %v873 = vmul.f32 %v827, %v865
    %v874 = vmul.f32 %v829, %v866
    %v875 = vmul.f32 %v831, %v867
    %v876 = vmul.f32 %v833, %v868
    %v877 = vmul.f32 %v835, %v869
    %v878 = vmul.f32 %v837, %v870
    %v879 = vmul.f32 %v839, %v871
    %880 = vrot.lane.b32.xlu0 %v161, 64
    %v881 = vpop.permute.xlu0 %880
    %v884 = vsel %vm185, %v872, 0
    %886 = vmatprep.subr.mxu0 0.0
    %887 = vmatpush1.msra.mxu0 %v881
    %888 = vmatprep.subr.mxu0 0.0
    %889 = vmatpush1.msra.mxu0 0.0
    %890 = vmatprep.subr.mxu0 0.0
    %891 = vmatpush1.msra.mxu0 0.0
    %892 = vmatprep.subr.mxu0 0.0
    %893 = vmatpush1.msra.mxu0 0.0
    %894 = vmatprep.subr.mxu0 0.0
    %895 = vmatpush1.msra.mxu0 0.0
    %896 = vmatprep.subr.mxu0 0.0
    %897 = vmatpush1.msra.mxu0 0.0
    %898 = vmatprep.subr.mxu0 0.0
    %899 = vmatpush1.msra.mxu0 0.0
    %900 = vmatprep.subr.mxu0 0.0
    %901 = vmatpush1.msra.mxu0 0.0
    %902 = vmatprep.subr.mxu0 0.0
    %903 = vmatpush1.msra.mxu0 0.0
    %904 = vmatprep.subr.mxu0 0.0
    %905 = vmatpush1.msra.mxu0 0.0
    %906 = vmatprep.subr.mxu0 0.0
    %907 = vmatpush1.msra.mxu0 0.0
    %908 = vmatprep.subr.mxu0 0.0
    %909 = vmatpush1.msra.mxu0 0.0
    %910 = vmatprep.subr.mxu0 0.0
    %911 = vmatpush1.msra.mxu0 0.0
    %912 = vmatprep.subr.mxu0 0.0
    %913 = vmatpush1.msra.mxu0 0.0
    %914 = vmatprep.subr.mxu0 0.0
    %915 = vmatpush1.msra.mxu0 0.0
    %916 = vmatprep.subr.mxu0 0.0
    %917 = vmatpush1.msra.mxu0 0.0
    %918 = vmatprep.subr.mxu0 0.0
    %919 = vmatpush1.msra.mxu0 0.0
    %920 = vmatprep.subr.mxu0 0.0
    %921 = vmatpush1.msra.mxu0 0.0
    %922 = vmatprep.subr.mxu0 0.0
    %923 = vmatpush1.msra.mxu0 0.0
    %924 = vmatprep.subr.mxu0 0.0
    %925 = vmatpush1.msra.mxu0 0.0
    %926 = vmatprep.subr.mxu0 0.0
    %927 = vmatpush1.msra.mxu0 0.0
    %928 = vmatprep.subr.mxu0 0.0
    %929 = vmatpush1.msra.mxu0 0.0
    %930 = vmatprep.subr.mxu0 0.0
    %931 = vmatpush1.msra.mxu0 0.0
    %932 = vmatprep.subr.mxu0 0.0
    %933 = vmatpush1.msra.mxu0 0.0
    %934 = vmatprep.subr.mxu0 0.0
    %935 = vmatpush1.msra.mxu0 0.0
    %936 = vmatprep.subr.mxu0 0.0
    %937 = vmatpush1.msra.mxu0 0.0
    %938 = vmatprep.subr.mxu0 0.0
    %939 = vmatpush1.msra.mxu0 0.0
    %940 = vmatprep.subr.mxu0 0.0
    %941 = vmatpush1.msra.mxu0 0.0
    %942 = vmatprep.subr.mxu0 0.0
    %943 = vmatpush1.msra.mxu0 0.0
    %944 = vmatprep.subr.mxu0 0.0
    %945 = vmatpush1.msra.mxu0 0.0
    %946 = vmatprep.subr.mxu0 0.0
    %947 = vmatpush1.msra.mxu0 0.0
    %948 = vmatprep.subr.mxu0 0.0
    %949 = vmatpush1.msra.mxu0 0.0
    %950 = vmatprep.mubr.f32.mxu0 0.0
    %951 = vmatmul.mubr.f32.gmra.mrb[0].mxu0 %v884
    %v952 = vpop.f32.mrb[0].mxu0
    %v953 = vadd.f32 0.0, %v952
    %v954 = vpop.f32.mrb[0].mxu0
    %955 = vdwg.mxu0
    %956 = vrot.lane.b32.xlu0 %v166, 64
    %v957 = vpop.permute.xlu0 %956
    %v960 = vsel %vm185, %v873, 0
    %962 = vmatprep.subr.mxu0 0.0
    %963 = vmatpush1.msra.mxu0 %v957
    %964 = vmatprep.subr.mxu0 0.0
    %965 = vmatpush1.msra.mxu0 0.0
    %966 = vmatprep.subr.mxu0 0.0
    %967 = vmatpush1.msra.mxu0 0.0
    %968 = vmatprep.subr.mxu0 0.0
    %969 = vmatpush1.msra.mxu0 0.0
    %970 = vmatprep.subr.mxu0 0.0
    %971 = vmatpush1.msra.mxu0 0.0
    %972 = vmatprep.subr.mxu0 0.0
    %973 = vmatpush1.msra.mxu0 0.0
    %974 = vmatprep.subr.mxu0 0.0
    %975 = vmatpush1.msra.mxu0 0.0
    %976 = vmatprep.subr.mxu0 0.0
    %977 = vmatpush1.msra.mxu0 0.0
    %978 = vmatprep.subr.mxu0 0.0
    %979 = vmatpush1.msra.mxu0 0.0
    %980 = vmatprep.subr.mxu0 0.0
    %981 = vmatpush1.msra.mxu0 0.0
    %982 = vmatprep.subr.mxu0 0.0
    %983 = vmatpush1.msra.mxu0 0.0
    %984 = vmatprep.subr.mxu0 0.0
    %985 = vmatpush1.msra.mxu0 0.0
    %986 = vmatprep.subr.mxu0 0.0
    %987 = vmatpush1.msra.mxu0 0.0
    %988 = vmatprep.subr.mxu0 0.0
    %989 = vmatpush1.msra.mxu0 0.0
    %990 = vmatprep.subr.mxu0 0.0
    %991 = vmatpush1.msra.mxu0 0.0
    %992 = vmatprep.subr.mxu0 0.0
    %993 = vmatpush1.msra.mxu0 0.0
    %994 = vmatprep.subr.mxu0 0.0
    %995 = vmatpush1.msra.mxu0 0.0
    %996 = vmatprep.subr.mxu0 0.0
    %997 = vmatpush1.msra.mxu0 0.0
    %998 = vmatprep.subr.mxu0 0.0
    %999 = vmatpush1.msra.mxu0 0.0
    %1000 = vmatprep.subr.mxu0 0.0
    %1001 = vmatpush1.msra.mxu0 0.0
    %1002 = vmatprep.subr.mxu0 0.0
    %1003 = vmatpush1.msra.mxu0 0.0
    %1004 = vmatprep.subr.mxu0 0.0
    %1005 = vmatpush1.msra.mxu0 0.0
    %1006 = vmatprep.subr.mxu0 0.0
    %1007 = vmatpush1.msra.mxu0 0.0
    %1008 = vmatprep.subr.mxu0 0.0
    %1009 = vmatpush1.msra.mxu0 0.0
    %1010 = vmatprep.subr.mxu0 0.0
    %1011 = vmatpush1.msra.mxu0 0.0
    %1012 = vmatprep.subr.mxu0 0.0
    %1013 = vmatpush1.msra.mxu0 0.0
    %1014 = vmatprep.subr.mxu0 0.0
    %1015 = vmatpush1.msra.mxu0 0.0
    %1016 = vmatprep.subr.mxu0 0.0
    %1017 = vmatpush1.msra.mxu0 0.0
    %1018 = vmatprep.subr.mxu0 0.0
    %1019 = vmatpush1.msra.mxu0 0.0
    %1020 = vmatprep.subr.mxu0 0.0
    %1021 = vmatpush1.msra.mxu0 0.0
    %1022 = vmatprep.subr.mxu0 0.0
    %1023 = vmatpush1.msra.mxu0 0.0
    %1024 = vmatprep.subr.mxu0 0.0
    %1025 = vmatpush1.msra.mxu0 0.0
    %1026 = vmatprep.mubr.f32.mxu0 0.0
    %1027 = vmatmul.mubr.f32.gmra.mrb[0].mxu0 %v960
    %v1028 = vpop.f32.mrb[0].mxu0
    %v1029 = vadd.f32 0.0, %v1028
    %v1030 = vpop.f32.mrb[0].mxu0
    %1031 = vdwg.mxu0
    %1032 = vrot.lane.b32.xlu0 %v172, 64
    %v1033 = vpop.permute.xlu0 %1032
    %v1036 = vsel %vm185, %v874, 0
    %1038 = vmatprep.subr.mxu0 0.0
    %1039 = vmatpush1.msra.mxu0 %v1033
    %1040 = vmatprep.subr.mxu0 0.0
    %1041 = vmatpush1.msra.mxu0 0.0
    %1042 = vmatprep.subr.mxu0 0.0
    %1043 = vmatpush1.msra.mxu0 0.0
    %1044 = vmatprep.subr.mxu0 0.0
    %1045 = vmatpush1.msra.mxu0 0.0
    %1046 = vmatprep.subr.mxu0 0.0
    %1047 = vmatpush1.msra.mxu0 0.0
    %1048 = vmatprep.subr.mxu0 0.0
    %1049 = vmatpush1.msra.mxu0 0.0
    %1050 = vmatprep.subr.mxu0 0.0
    %1051 = vmatpush1.msra.mxu0 0.0
    %1052 = vmatprep.subr.mxu0 0.0
    %1053 = vmatpush1.msra.mxu0 0.0
    %1054 = vmatprep.subr.mxu0 0.0
    %1055 = vmatpush1.msra.mxu0 0.0
    %1056 = vmatprep.subr.mxu0 0.0
    %1057 = vmatpush1.msra.mxu0 0.0
    %1058 = vmatprep.subr.mxu0 0.0
    %1059 = vmatpush1.msra.mxu0 0.0
    %1060 = vmatprep.subr.mxu0 0.0
    %1061 = vmatpush1.msra.mxu0 0.0
    %1062 = vmatprep.subr.mxu0 0.0
    %1063 = vmatpush1.msra.mxu0 0.0
    %1064 = vmatprep.subr.mxu0 0.0
    %1065 = vmatpush1.msra.mxu0 0.0
    %1066 = vmatprep.subr.mxu0 0.0
    %1067 = vmatpush1.msra.mxu0 0.0
    %1068 = vmatprep.subr.mxu0 0.0
    %1069 = vmatpush1.msra.mxu0 0.0
    %1070 = vmatprep.subr.mxu0 0.0
    %1071 = vmatpush1.msra.mxu0 0.0
    %1072 = vmatprep.subr.mxu0 0.0
    %1073 = vmatpush1.msra.mxu0 0.0
    %1074 = vmatprep.subr.mxu0 0.0
    %1075 = vmatpush1.msra.mxu0 0.0
    %1076 = vmatprep.subr.mxu0 0.0
    %1077 = vmatpush1.msra.mxu0 0.0
    %1078 = vmatprep.subr.mxu0 0.0
    %1079 = vmatpush1.msra.mxu0 0.0
    %1080 = vmatprep.subr.mxu0 0.0
    %1081 = vmatpush1.msra.mxu0 0.0
    %1082 = vmatprep.subr.mxu0 0.0
    %1083 = vmatpush1.msra.mxu0 0.0
    %1084 = vmatprep.subr.mxu0 0.0
    %1085 = vmatpush1.msra.mxu0 0.0
    %1086 = vmatprep.subr.mxu0 0.0
    %1087 = vmatpush1.msra.mxu0 0.0
    %1088 = vmatprep.subr.mxu0 0.0
    %1089 = vmatpush1.msra.mxu0 0.0
    %1090 = vmatprep.subr.mxu0 0.0
    %1091 = vmatpush1.msra.mxu0 0.0
    %1092 = vmatprep.subr.mxu0 0.0
    %1093 = vmatpush1.msra.mxu0 0.0
    %1094 = vmatprep.subr.mxu0 0.0
    %1095 = vmatpush1.msra.mxu0 0.0
    %1096 = vmatprep.subr.mxu0 0.0
    %1097 = vmatpush1.msra.mxu0 0.0
    %1098 = vmatprep.subr.mxu0 0.0
    %1099 = vmatpush1.msra.mxu0 0.0
    %1100 = vmatprep.subr.mxu0 0.0
    %1101 = vmatpush1.msra.mxu0 0.0
    %1102 = vmatprep.mubr.f32.mxu0 0.0
    %1103 = vmatmul.mubr.f32.gmra.mrb[0].mxu0 %v1036
    %v1104 = vpop.f32.mrb[0].mxu0
    %v1105 = vadd.f32 0.0, %v1104
    %v1106 = vpop.f32.mrb[0].mxu0
    %1107 = vdwg.mxu0
    %1108 = vrot.lane.b32.xlu0 %v174, 64
    %v1109 = vpop.permute.xlu0 %1108
    %v1112 = vsel %vm185, %v875, 0
    %1114 = vmatprep.subr.mxu0 0.0
    %1115 = vmatpush1.msra.mxu0 %v1109
    %1116 = vmatprep.subr.mxu0 0.0
    %1117 = vmatpush1.msra.mxu0 0.0
    %1118 = vmatprep.subr.mxu0 0.0
    %1119 = vmatpush1.msra.mxu0 0.0
    %1120 = vmatprep.subr.mxu0 0.0
    %1121 = vmatpush1.msra.mxu0 0.0
    %1122 = vmatprep.subr.mxu0 0.0
    %1123 = vmatpush1.msra.mxu0 0.0
    %1124 = vmatprep.subr.mxu0 0.0
    %1125 = vmatpush1.msra.mxu0 0.0
    %1126 = vmatprep.subr.mxu0 0.0
    %1127 = vmatpush1.msra.mxu0 0.0
    %1128 = vmatprep.subr.mxu0 0.0
    %1129 = vmatpush1.msra.mxu0 0.0
    %1130 = vmatprep.subr.mxu0 0.0
    %1131 = vmatpush1.msra.mxu0 0.0
    %1132 = vmatprep.subr.mxu0 0.0
    %1133 = vmatpush1.msra.mxu0 0.0
    %1134 = vmatprep.subr.mxu0 0.0
    %1135 = vmatpush1.msra.mxu0 0.0
    %1136 = vmatprep.subr.mxu0 0.0
    %1137 = vmatpush1.msra.mxu0 0.0
    %1138 = vmatprep.subr.mxu0 0.0
    %1139 = vmatpush1.msra.mxu0 0.0
    %1140 = vmatprep.subr.mxu0 0.0
    %1141 = vmatpush1.msra.mxu0 0.0
    %1142 = vmatprep.subr.mxu0 0.0
    %1143 = vmatpush1.msra.mxu0 0.0
    %1144 = vmatprep.subr.mxu0 0.0
    %1145 = vmatpush1.msra.mxu0 0.0
    %1146 = vmatprep.subr.mxu0 0.0
    %1147 = vmatpush1.msra.mxu0 0.0
    %1148 = vmatprep.subr.mxu0 0.0
    %1149 = vmatpush1.msra.mxu0 0.0
    %1150 = vmatprep.subr.mxu0 0.0
    %1151 = vmatpush1.msra.mxu0 0.0
    %1152 = vmatprep.subr.mxu0 0.0
    %1153 = vmatpush1.msra.mxu0 0.0
    %1154 = vmatprep.subr.mxu0 0.0
    %1155 = vmatpush1.msra.mxu0 0.0
    %1156 = vmatprep.subr.mxu0 0.0
    %1157 = vmatpush1.msra.mxu0 0.0
    %1158 = vmatprep.subr.mxu0 0.0
    %1159 = vmatpush1.msra.mxu0 0.0
    %1160 = vmatprep.subr.mxu0 0.0
    %1161 = vmatpush1.msra.mxu0 0.0
    %1162 = vmatprep.subr.mxu0 0.0
    %1163 = vmatpush1.msra.mxu0 0.0
    %1164 = vmatprep.subr.mxu0 0.0
    %1165 = vmatpush1.msra.mxu0 0.0
    %1166 = vmatprep.subr.mxu0 0.0
    %1167 = vmatpush1.msra.mxu0 0.0
    %1168 = vmatprep.subr.mxu0 0.0
    %1169 = vmatpush1.msra.mxu0 0.0
    %1170 = vmatprep.subr.mxu0 0.0
    %1171 = vmatpush1.msra.mxu0 0.0
    %1172 = vmatprep.subr.mxu0 0.0
    %1173 = vmatpush1.msra.mxu0 0.0
    %1174 = vmatprep.subr.mxu0 0.0
    %1175 = vmatpush1.msra.mxu0 0.0
    %1176 = vmatprep.subr.mxu0 0.0
    %1177 = vmatpush1.msra.mxu0 0.0
    %1178 = vmatprep.mubr.f32.mxu0 0.0
    %1179 = vmatmul.mubr.f32.gmra.mrb[0].mxu0 %v1112
    %v1180 = vpop.f32.mrb[0].mxu0
    %v1181 = vadd.f32 0.0, %v1180
    %v1182 = vpop.f32.mrb[0].mxu0
    %1183 = vdwg.mxu0
    %1184 = vrot.lane.b32.xlu0 %v176, 64
    %v1185 = vpop.permute.xlu0 %1184
    %v1188 = vsel %vm185, %v876, 0
    %1190 = vmatprep.subr.mxu0 0.0
    %1191 = vmatpush1.msra.mxu0 %v1185
    %1192 = vmatprep.subr.mxu0 0.0
    %1193 = vmatpush1.msra.mxu0 0.0
    %1194 = vmatprep.subr.mxu0 0.0
    %1195 = vmatpush1.msra.mxu0 0.0
    %1196 = vmatprep.subr.mxu0 0.0
    %1197 = vmatpush1.msra.mxu0 0.0
    %1198 = vmatprep.subr.mxu0 0.0
    %1199 = vmatpush1.msra.mxu0 0.0
    %1200 = vmatprep.subr.mxu0 0.0
    %1201 = vmatpush1.msra.mxu0 0.0
    %1202 = vmatprep.subr.mxu0 0.0
    %1203 = vmatpush1.msra.mxu0 0.0
    %1204 = vmatprep.subr.mxu0 0.0
    %1205 = vmatpush1.msra.mxu0 0.0
    %1206 = vmatprep.subr.mxu0 0.0
    %1207 = vmatpush1.msra.mxu0 0.0
    %1208 = vmatprep.subr.mxu0 0.0
    %1209 = vmatpush1.msra.mxu0 0.0
    %1210 = vmatprep.subr.mxu0 0.0
    %1211 = vmatpush1.msra.mxu0 0.0
    %1212 = vmatprep.subr.mxu0 0.0
    %1213 = vmatpush1.msra.mxu0 0.0
    %1214 = vmatprep.subr.mxu0 0.0
    %1215 = vmatpush1.msra.mxu0 0.0
    %1216 = vmatprep.subr.mxu0 0.0
    %1217 = vmatpush1.msra.mxu0 0.0
    %1218 = vmatprep.subr.mxu0 0.0
    %1219 = vmatpush1.msra.mxu0 0.0
    %1220 = vmatprep.subr.mxu0 0.0
    %1221 = vmatpush1.msra.mxu0 0.0
    %1222 = vmatprep.subr.mxu0 0.0
    %1223 = vmatpush1.msra.mxu0 0.0
    %1224 = vmatprep.subr.mxu0 0.0
    %1225 = vmatpush1.msra.mxu0 0.0
    %1226 = vmatprep.subr.mxu0 0.0
    %1227 = vmatpush1.msra.mxu0 0.0
    %1228 = vmatprep.subr.mxu0 0.0
    %1229 = vmatpush1.msra.mxu0 0.0
    %1230 = vmatprep.subr.mxu0 0.0
    %1231 = vmatpush1.msra.mxu0 0.0
    %1232 = vmatprep.subr.mxu0 0.0
    %1233 = vmatpush1.msra.mxu0 0.0
    %1234 = vmatprep.subr.mxu0 0.0
    %1235 = vmatpush1.msra.mxu0 0.0
    %1236 = vmatprep.subr.mxu0 0.0
    %1237 = vmatpush1.msra.mxu0 0.0
    %1238 = vmatprep.subr.mxu0 0.0
    %1239 = vmatpush1.msra.mxu0 0.0
    %1240 = vmatprep.subr.mxu0 0.0
    %1241 = vmatpush1.msra.mxu0 0.0
    %1242 = vmatprep.subr.mxu0 0.0
    %1243 = vmatpush1.msra.mxu0 0.0
    %1244 = vmatprep.subr.mxu0 0.0
    %1245 = vmatpush1.msra.mxu0 0.0
    %1246 = vmatprep.subr.mxu0 0.0
    %1247 = vmatpush1.msra.mxu0 0.0
    %1248 = vmatprep.subr.mxu0 0.0
    %1249 = vmatpush1.msra.mxu0 0.0
    %1250 = vmatprep.subr.mxu0 0.0
    %1251 = vmatpush1.msra.mxu0 0.0
    %1252 = vmatprep.subr.mxu0 0.0
    %1253 = vmatpush1.msra.mxu0 0.0
    %1254 = vmatprep.mubr.f32.mxu0 0.0
    %1255 = vmatmul.mubr.f32.gmra.mrb[0].mxu0 %v1188
    %v1256 = vpop.f32.mrb[0].mxu0
    %v1257 = vadd.f32 0.0, %v1256
    %v1258 = vpop.f32.mrb[0].mxu0
    %1259 = vdwg.mxu0
    %1260 = vrot.lane.b32.xlu0 %v178, 64
    %v1261 = vpop.permute.xlu0 %1260
    %v1264 = vsel %vm185, %v877, 0
    %1266 = vmatprep.subr.mxu0 0.0
    %1267 = vmatpush1.msra.mxu0 %v1261
    %1268 = vmatprep.subr.mxu0 0.0
    %1269 = vmatpush1.msra.mxu0 0.0
    %1270 = vmatprep.subr.mxu0 0.0
    %1271 = vmatpush1.msra.mxu0 0.0
    %1272 = vmatprep.subr.mxu0 0.0
    %1273 = vmatpush1.msra.mxu0 0.0
    %1274 = vmatprep.subr.mxu0 0.0
    %1275 = vmatpush1.msra.mxu0 0.0
    %1276 = vmatprep.subr.mxu0 0.0
    %1277 = vmatpush1.msra.mxu0 0.0
    %1278 = vmatprep.subr.mxu0 0.0
    %1279 = vmatpush1.msra.mxu0 0.0
    %1280 = vmatprep.subr.mxu0 0.0
    %1281 = vmatpush1.msra.mxu0 0.0
    %1282 = vmatprep.subr.mxu0 0.0
    %1283 = vmatpush1.msra.mxu0 0.0
    %1284 = vmatprep.subr.mxu0 0.0
    %1285 = vmatpush1.msra.mxu0 0.0
    %1286 = vmatprep.subr.mxu0 0.0
    %1287 = vmatpush1.msra.mxu0 0.0
    %1288 = vmatprep.subr.mxu0 0.0
    %1289 = vmatpush1.msra.mxu0 0.0
    %1290 = vmatprep.subr.mxu0 0.0
    %1291 = vmatpush1.msra.mxu0 0.0
    %1292 = vmatprep.subr.mxu0 0.0
    %1293 = vmatpush1.msra.mxu0 0.0
    %1294 = vmatprep.subr.mxu0 0.0
    %1295 = vmatpush1.msra.mxu0 0.0
    %1296 = vmatprep.subr.mxu0 0.0
    %1297 = vmatpush1.msra.mxu0 0.0
    %1298 = vmatprep.subr.mxu0 0.0
    %1299 = vmatpush1.msra.mxu0 0.0
    %1300 = vmatprep.subr.mxu0 0.0
    %1301 = vmatpush1.msra.mxu0 0.0
    %1302 = vmatprep.subr.mxu0 0.0
    %1303 = vmatpush1.msra.mxu0 0.0
    %1304 = vmatprep.subr.mxu0 0.0
    %1305 = vmatpush1.msra.mxu0 0.0
    %1306 = vmatprep.subr.mxu0 0.0
    %1307 = vmatpush1.msra.mxu0 0.0
    %1308 = vmatprep.subr.mxu0 0.0
    %1309 = vmatpush1.msra.mxu0 0.0
    %1310 = vmatprep.subr.mxu0 0.0
    %1311 = vmatpush1.msra.mxu0 0.0
    %1312 = vmatprep.subr.mxu0 0.0
    %1313 = vmatpush1.msra.mxu0 0.0
    %1314 = vmatprep.subr.mxu0 0.0
    %1315 = vmatpush1.msra.mxu0 0.0
    %1316 = vmatprep.subr.mxu0 0.0
    %1317 = vmatpush1.msra.mxu0 0.0
    %1318 = vmatprep.subr.mxu0 0.0
    %1319 = vmatpush1.msra.mxu0 0.0
    %1320 = vmatprep.subr.mxu0 0.0
    %1321 = vmatpush1.msra.mxu0 0.0
    %1322 = vmatprep.subr.mxu0 0.0
    %1323 = vmatpush1.msra.mxu0 0.0
    %1324 = vmatprep.subr.mxu0 0.0
    %1325 = vmatpush1.msra.mxu0 0.0
    %1326 = vmatprep.subr.mxu0 0.0
    %1327 = vmatpush1.msra.mxu0 0.0
    %1328 = vmatprep.subr.mxu0 0.0
    %1329 = vmatpush1.msra.mxu0 0.0
    %1330 = vmatprep.mubr.f32.mxu0 0.0
    %1331 = vmatmul.mubr.f32.gmra.mrb[0].mxu0 %v1264
    %v1332 = vpop.f32.mrb[0].mxu0
    %v1333 = vadd.f32 0.0, %v1332
    %v1334 = vpop.f32.mrb[0].mxu0
    %1335 = vdwg.mxu0
    %1336 = vrot.lane.b32.xlu0 %v180, 64
    %v1337 = vpop.permute.xlu0 %1336
    %v1340 = vsel %vm185, %v878, 0
    %1342 = vmatprep.subr.mxu0 0.0
    %1343 = vmatpush1.msra.mxu0 %v1337
    %1344 = vmatprep.subr.mxu0 0.0
    %1345 = vmatpush1.msra.mxu0 0.0
    %1346 = vmatprep.subr.mxu0 0.0
    %1347 = vmatpush1.msra.mxu0 0.0
    %1348 = vmatprep.subr.mxu0 0.0
    %1349 = vmatpush1.msra.mxu0 0.0
    %1350 = vmatprep.subr.mxu0 0.0
    %1351 = vmatpush1.msra.mxu0 0.0
    %1352 = vmatprep.subr.mxu0 0.0
    %1353 = vmatpush1.msra.mxu0 0.0
    %1354 = vmatprep.subr.mxu0 0.0
    %1355 = vmatpush1.msra.mxu0 0.0
    %1356 = vmatprep.subr.mxu0 0.0
    %1357 = vmatpush1.msra.mxu0 0.0
    %1358 = vmatprep.subr.mxu0 0.0
    %1359 = vmatpush1.msra.mxu0 0.0
    %1360 = vmatprep.subr.mxu0 0.0
    %1361 = vmatpush1.msra.mxu0 0.0
    %1362 = vmatprep.subr.mxu0 0.0
    %1363 = vmatpush1.msra.mxu0 0.0
    %1364 = vmatprep.subr.mxu0 0.0
    %1365 = vmatpush1.msra.mxu0 0.0
    %1366 = vmatprep.subr.mxu0 0.0
    %1367 = vmatpush1.msra.mxu0 0.0
    %1368 = vmatprep.subr.mxu0 0.0
    %1369 = vmatpush1.msra.mxu0 0.0
    %1370 = vmatprep.subr.mxu0 0.0
    %1371 = vmatpush1.msra.mxu0 0.0
    %1372 = vmatprep.subr.mxu0 0.0
    %1373 = vmatpush1.msra.mxu0 0.0
    %1374 = vmatprep.subr.mxu0 0.0
    %1375 = vmatpush1.msra.mxu0 0.0
    %1376 = vmatprep.subr.mxu0 0.0
    %1377 = vmatpush1.msra.mxu0 0.0
    %1378 = vmatprep.subr.mxu0 0.0
    %1379 = vmatpush1.msra.mxu0 0.0
    %1380 = vmatprep.subr.mxu0 0.0
    %1381 = vmatpush1.msra.mxu0 0.0
    %1382 = vmatprep.subr.mxu0 0.0
    %1383 = vmatpush1.msra.mxu0 0.0
    %1384 = vmatprep.subr.mxu0 0.0
    %1385 = vmatpush1.msra.mxu0 0.0
    %1386 = vmatprep.subr.mxu0 0.0
    %1387 = vmatpush1.msra.mxu0 0.0
    %1388 = vmatprep.subr.mxu0 0.0
    %1389 = vmatpush1.msra.mxu0 0.0
    %1390 = vmatprep.subr.mxu0 0.0
    %1391 = vmatpush1.msra.mxu0 0.0
    %1392 = vmatprep.subr.mxu0 0.0
    %1393 = vmatpush1.msra.mxu0 0.0
    %1394 = vmatprep.subr.mxu0 0.0
    %1395 = vmatpush1.msra.mxu0 0.0
    %1396 = vmatprep.subr.mxu0 0.0
    %1397 = vmatpush1.msra.mxu0 0.0
    %1398 = vmatprep.subr.mxu0 0.0
    %1399 = vmatpush1.msra.mxu0 0.0
    %1400 = vmatprep.subr.mxu0 0.0
    %1401 = vmatpush1.msra.mxu0 0.0
    %1402 = vmatprep.subr.mxu0 0.0
    %1403 = vmatpush1.msra.mxu0 0.0
    %1404 = vmatprep.subr.mxu0 0.0
    %1405 = vmatpush1.msra.mxu0 0.0
    %1406 = vmatprep.mubr.f32.mxu0 0.0
    %1407 = vmatmul.mubr.f32.gmra.mrb[0].mxu0 %v1340
    %v1408 = vpop.f32.mrb[0].mxu0
    %v1409 = vadd.f32 0.0, %v1408
    %v1410 = vpop.f32.mrb[0].mxu0
    %1411 = vdwg.mxu0
    %1412 = vrot.lane.b32.xlu0 %v182, 64
    %v1413 = vpop.permute.xlu0 %1412
    %v1416 = vsel %vm185, %v879, 0
    %1418 = vmatprep.subr.mxu0 0.0
    %1419 = vmatpush1.msra.mxu0 %v1413
    %1420 = vmatprep.subr.mxu0 0.0
    %1421 = vmatpush1.msra.mxu0 0.0
    %1422 = vmatprep.subr.mxu0 0.0
    %1423 = vmatpush1.msra.mxu0 0.0
    %1424 = vmatprep.subr.mxu0 0.0
    %1425 = vmatpush1.msra.mxu0 0.0
    %1426 = vmatprep.subr.mxu0 0.0
    %1427 = vmatpush1.msra.mxu0 0.0
    %1428 = vmatprep.subr.mxu0 0.0
    %1429 = vmatpush1.msra.mxu0 0.0
    %1430 = vmatprep.subr.mxu0 0.0
    %1431 = vmatpush1.msra.mxu0 0.0
    %1432 = vmatprep.subr.mxu0 0.0
    %1433 = vmatpush1.msra.mxu0 0.0
    %1434 = vmatprep.subr.mxu0 0.0
    %1435 = vmatpush1.msra.mxu0 0.0
    %1436 = vmatprep.subr.mxu0 0.0
    %1437 = vmatpush1.msra.mxu0 0.0
    %1438 = vmatprep.subr.mxu0 0.0
    %1439 = vmatpush1.msra.mxu0 0.0
    %1440 = vmatprep.subr.mxu0 0.0
    %1441 = vmatpush1.msra.mxu0 0.0
    %1442 = vmatprep.subr.mxu0 0.0
    %1443 = vmatpush1.msra.mxu0 0.0
    %1444 = vmatprep.subr.mxu0 0.0
    %1445 = vmatpush1.msra.mxu0 0.0
    %1446 = vmatprep.subr.mxu0 0.0
    %1447 = vmatpush1.msra.mxu0 0.0
    %1448 = vmatprep.subr.mxu0 0.0
    %1449 = vmatpush1.msra.mxu0 0.0
    %1450 = vmatprep.subr.mxu0 0.0
    %1451 = vmatpush1.msra.mxu0 0.0
    %1452 = vmatprep.subr.mxu0 0.0
    %1453 = vmatpush1.msra.mxu0 0.0
    %1454 = vmatprep.subr.mxu0 0.0
    %1455 = vmatpush1.msra.mxu0 0.0
    %1456 = vmatprep.subr.mxu0 0.0
    %1457 = vmatpush1.msra.mxu0 0.0
    %1458 = vmatprep.subr.mxu0 0.0
    %1459 = vmatpush1.msra.mxu0 0.0
    %1460 = vmatprep.subr.mxu0 0.0
    %1461 = vmatpush1.msra.mxu0 0.0
    %1462 = vmatprep.subr.mxu0 0.0
    %1463 = vmatpush1.msra.mxu0 0.0
    %1464 = vmatprep.subr.mxu0 0.0
    %1465 = vmatpush1.msra.mxu0 0.0
    %1466 = vmatprep.subr.mxu0 0.0
    %1467 = vmatpush1.msra.mxu0 0.0
    %1468 = vmatprep.subr.mxu0 0.0
    %1469 = vmatpush1.msra.mxu0 0.0
    %1470 = vmatprep.subr.mxu0 0.0
    %1471 = vmatpush1.msra.mxu0 0.0
    %1472 = vmatprep.subr.mxu0 0.0
    %1473 = vmatpush1.msra.mxu0 0.0
    %1474 = vmatprep.subr.mxu0 0.0
    %1475 = vmatpush1.msra.mxu0 0.0
    %1476 = vmatprep.subr.mxu0 0.0
    %1477 = vmatpush1.msra.mxu0 0.0
    %1478 = vmatprep.subr.mxu0 0.0
    %1479 = vmatpush1.msra.mxu0 0.0
    %1480 = vmatprep.subr.mxu0 0.0
    %1481 = vmatpush1.msra.mxu0 0.0
    %1482 = vmatprep.mubr.f32.mxu0 0.0
    %1483 = vmatmul.mubr.f32.gmra.mrb[0].mxu0 %v1416
    %v1484 = vpop.f32.mrb[0].mxu0
    %v1485 = vadd.f32 0.0, %v1484
    %v1486 = vpop.f32.mrb[0].mxu0
    %1487 = vdwg.mxu0
    %v1489 = vsel %vm185, %v953, 0
    %v1492 = vsel %vm185, %v1029, 0
    %1494 = vmatprep.subr.mxu0 0.0
    %1495 = vmatpush1.msra.mxu0 %v33
    %1496 = vmatprep.subr.mxu0 0.0
    %1497 = vmatpush1.msra.mxu0 0.0
    %1498 = vmatprep.subr.mxu0 0.0
    %1499 = vmatpush1.msra.mxu0 0.0
    %1500 = vmatprep.subr.mxu0 0.0
    %1501 = vmatpush1.msra.mxu0 0.0
    %1502 = vmatprep.subr.mxu0 0.0
    %1503 = vmatpush1.msra.mxu0 0.0
    %1504 = vmatprep.subr.mxu0 0.0
    %1505 = vmatpush1.msra.mxu0 0.0
    %1506 = vmatprep.subr.mxu0 0.0
    %1507 = vmatpush1.msra.mxu0 0.0
    %1508 = vmatprep.subr.mxu0 0.0
    %1509 = vmatpush1.msra.mxu0 0.0
    %1510 = vmatprep.subr.mxu0 0.0
    %1511 = vmatpush1.msra.mxu0 0.0
    %1512 = vmatprep.subr.mxu0 0.0
    %1513 = vmatpush1.msra.mxu0 0.0
    %1514 = vmatprep.subr.mxu0 0.0
    %1515 = vmatpush1.msra.mxu0 0.0
    %1516 = vmatprep.subr.mxu0 0.0
    %1517 = vmatpush1.msra.mxu0 0.0
    %1518 = vmatprep.subr.mxu0 0.0
    %1519 = vmatpush1.msra.mxu0 0.0
    %1520 = vmatprep.subr.mxu0 0.0
    %1521 = vmatpush1.msra.mxu0 0.0
    %1522 = vmatprep.subr.mxu0 0.0
    %1523 = vmatpush1.msra.mxu0 0.0
    %1524 = vmatprep.subr.mxu0 0.0
    %1525 = vmatpush1.msra.mxu0 0.0
    %1526 = vmatprep.subr.mxu0 0.0
    %1527 = vmatpush1.msra.mxu0 0.0
    %1528 = vmatprep.subr.mxu0 0.0
    %1529 = vmatpush1.msra.mxu0 0.0
    %1530 = vmatprep.subr.mxu0 0.0
    %1531 = vmatpush1.msra.mxu0 0.0
    %1532 = vmatprep.subr.mxu0 0.0
    %1533 = vmatpush1.msra.mxu0 0.0
    %1534 = vmatprep.subr.mxu0 0.0
    %1535 = vmatpush1.msra.mxu0 0.0
    %1536 = vmatprep.subr.mxu0 0.0
    %1537 = vmatpush1.msra.mxu0 0.0
    %1538 = vmatprep.subr.mxu0 0.0
    %1539 = vmatpush1.msra.mxu0 0.0
    %1540 = vmatprep.subr.mxu0 0.0
    %1541 = vmatpush1.msra.mxu0 0.0
    %1542 = vmatprep.subr.mxu0 0.0
    %1543 = vmatpush1.msra.mxu0 0.0
    %1544 = vmatprep.subr.mxu0 0.0
    %1545 = vmatpush1.msra.mxu0 0.0
    %1546 = vmatprep.subr.mxu0 0.0
    %1547 = vmatpush1.msra.mxu0 0.0
    %1548 = vmatprep.subr.mxu0 0.0
    %1549 = vmatpush1.msra.mxu0 0.0
    %1550 = vmatprep.subr.mxu0 0.0
    %1551 = vmatpush1.msra.mxu0 0.0
    %1552 = vmatprep.subr.mxu0 0.0
    %1553 = vmatpush1.msra.mxu0 0.0
    %1554 = vmatprep.subr.mxu0 0.0
    %1555 = vmatpush1.msra.mxu0 0.0
    %1556 = vmatprep.subr.mxu0 0.0
    %1557 = vmatpush1.msra.mxu0 0.0
    %1558 = vmatprep.mubr.f32.mxu0 0.0
    %1559 = vmatmul.mubr.f32.gmra.mrb[0].mxu0 %v1489
    %v1560 = vpop.f32.mrb[0].mxu0
    %v1561 = vadd.f32 0.0, %v1560
    %v1562 = vpop.f32.mrb[0].mxu0
    %1563 = vmatprep.mubr.f32.mxu0 0.0
    %1564 = vmatmul.mubr.f32.gmra.mrb[0].mxu0 %v1492
    %v1565 = vpop.f32.mrb[0].mxu0
    %v1566 = vadd.f32 0.0, %v1565
    %v1567 = vpop.f32.mrb[0].mxu0
    %1568 = vdwg.mxu0
    %v1570 = vsel %vm185, %v1105, 0
    %v1573 = vsel %vm185, %v1181, 0
    %1575 = vmatprep.subr.mxu0 0.0
    %1576 = vmatpush1.msra.mxu0 %v34
    %1577 = vmatprep.subr.mxu0 0.0
    %1578 = vmatpush1.msra.mxu0 0.0
    %1579 = vmatprep.subr.mxu0 0.0
    %1580 = vmatpush1.msra.mxu0 0.0
    %1581 = vmatprep.subr.mxu0 0.0
    %1582 = vmatpush1.msra.mxu0 0.0
    %1583 = vmatprep.subr.mxu0 0.0
    %1584 = vmatpush1.msra.mxu0 0.0
    %1585 = vmatprep.subr.mxu0 0.0
    %1586 = vmatpush1.msra.mxu0 0.0
    %1587 = vmatprep.subr.mxu0 0.0
    %1588 = vmatpush1.msra.mxu0 0.0
    %1589 = vmatprep.subr.mxu0 0.0
    %1590 = vmatpush1.msra.mxu0 0.0
    %1591 = vmatprep.subr.mxu0 0.0
    %1592 = vmatpush1.msra.mxu0 0.0
    %1593 = vmatprep.subr.mxu0 0.0
    %1594 = vmatpush1.msra.mxu0 0.0
    %1595 = vmatprep.subr.mxu0 0.0
    %1596 = vmatpush1.msra.mxu0 0.0
    %1597 = vmatprep.subr.mxu0 0.0
    %1598 = vmatpush1.msra.mxu0 0.0
    %1599 = vmatprep.subr.mxu0 0.0
    %1600 = vmatpush1.msra.mxu0 0.0
    %1601 = vmatprep.subr.mxu0 0.0
    %1602 = vmatpush1.msra.mxu0 0.0
    %1603 = vmatprep.subr.mxu0 0.0
    %1604 = vmatpush1.msra.mxu0 0.0
    %1605 = vmatprep.subr.mxu0 0.0
    %1606 = vmatpush1.msra.mxu0 0.0
    %1607 = vmatprep.subr.mxu0 0.0
    %1608 = vmatpush1.msra.mxu0 0.0
    %1609 = vmatprep.subr.mxu0 0.0
    %1610 = vmatpush1.msra.mxu0 0.0
    %1611 = vmatprep.subr.mxu0 0.0
    %1612 = vmatpush1.msra.mxu0 0.0
    %1613 = vmatprep.subr.mxu0 0.0
    %1614 = vmatpush1.msra.mxu0 0.0
    %1615 = vmatprep.subr.mxu0 0.0
    %1616 = vmatpush1.msra.mxu0 0.0
    %1617 = vmatprep.subr.mxu0 0.0
    %1618 = vmatpush1.msra.mxu0 0.0
    %1619 = vmatprep.subr.mxu0 0.0
    %1620 = vmatpush1.msra.mxu0 0.0
    %1621 = vmatprep.subr.mxu0 0.0
    %1622 = vmatpush1.msra.mxu0 0.0
    %1623 = vmatprep.subr.mxu0 0.0
    %1624 = vmatpush1.msra.mxu0 0.0
    %1625 = vmatprep.subr.mxu0 0.0
    %1626 = vmatpush1.msra.mxu0 0.0
    %1627 = vmatprep.subr.mxu0 0.0
    %1628 = vmatpush1.msra.mxu0 0.0
    %1629 = vmatprep.subr.mxu0 0.0
    %1630 = vmatpush1.msra.mxu0 0.0
    %1631 = vmatprep.subr.mxu0 0.0
    %1632 = vmatpush1.msra.mxu0 0.0
    %1633 = vmatprep.subr.mxu0 0.0
    %1634 = vmatpush1.msra.mxu0 0.0
    %1635 = vmatprep.subr.mxu0 0.0
    %1636 = vmatpush1.msra.mxu0 0.0
    %1637 = vmatprep.subr.mxu0 0.0
    %1638 = vmatpush1.msra.mxu0 0.0
    %1639 = vmatprep.mubr.f32.mxu0 0.0
    %1640 = vmatmul.mubr.f32.gmra.mrb[0].mxu0 %v1570
    %v1641 = vpop.f32.mrb[0].mxu0
    %v1642 = vadd.f32 0.0, %v1641
    %v1643 = vpop.f32.mrb[0].mxu0
    %1644 = vmatprep.mubr.f32.mxu0 0.0
    %1645 = vmatmul.mubr.f32.gmra.mrb[0].mxu0 %v1573
    %v1646 = vpop.f32.mrb[0].mxu0
    %v1647 = vadd.f32 0.0, %v1646
    %v1648 = vpop.f32.mrb[0].mxu0
    %1649 = vdwg.mxu0
    %v1651 = vsel %vm185, %v1257, 0
    %v1654 = vsel %vm185, %v1333, 0
    %1656 = vmatprep.subr.mxu0 0.0
    %1657 = vmatpush1.msra.mxu0 %v35
    %1658 = vmatprep.subr.mxu0 0.0
    %1659 = vmatpush1.msra.mxu0 0.0
    %1660 = vmatprep.subr.mxu0 0.0
    %1661 = vmatpush1.msra.mxu0 0.0
    %1662 = vmatprep.subr.mxu0 0.0
    %1663 = vmatpush1.msra.mxu0 0.0
    %1664 = vmatprep.subr.mxu0 0.0
    %1665 = vmatpush1.msra.mxu0 0.0
    %1666 = vmatprep.subr.mxu0 0.0
    %1667 = vmatpush1.msra.mxu0 0.0
    %1668 = vmatprep.subr.mxu0 0.0
    %1669 = vmatpush1.msra.mxu0 0.0
    %1670 = vmatprep.subr.mxu0 0.0
    %1671 = vmatpush1.msra.mxu0 0.0
    %1672 = vmatprep.subr.mxu0 0.0
    %1673 = vmatpush1.msra.mxu0 0.0
    %1674 = vmatprep.subr.mxu0 0.0
    %1675 = vmatpush1.msra.mxu0 0.0
    %1676 = vmatprep.subr.mxu0 0.0
    %1677 = vmatpush1.msra.mxu0 0.0
    %1678 = vmatprep.subr.mxu0 0.0
    %1679 = vmatpush1.msra.mxu0 0.0
    %1680 = vmatprep.subr.mxu0 0.0
    %1681 = vmatpush1.msra.mxu0 0.0
    %1682 = vmatprep.subr.mxu0 0.0
    %1683 = vmatpush1.msra.mxu0 0.0
    %1684 = vmatprep.subr.mxu0 0.0
    %1685 = vmatpush1.msra.mxu0 0.0
    %1686 = vmatprep.subr.mxu0 0.0
    %1687 = vmatpush1.msra.mxu0 0.0
    %1688 = vmatprep.subr.mxu0 0.0
    %1689 = vmatpush1.msra.mxu0 0.0
    %1690 = vmatprep.subr.mxu0 0.0
    %1691 = vmatpush1.msra.mxu0 0.0
    %1692 = vmatprep.subr.mxu0 0.0
    %1693 = vmatpush1.msra.mxu0 0.0
    %1694 = vmatprep.subr.mxu0 0.0
    %1695 = vmatpush1.msra.mxu0 0.0
    %1696 = vmatprep.subr.mxu0 0.0
    %1697 = vmatpush1.msra.mxu0 0.0
    %1698 = vmatprep.subr.mxu0 0.0
    %1699 = vmatpush1.msra.mxu0 0.0
    %1700 = vmatprep.subr.mxu0 0.0
    %1701 = vmatpush1.msra.mxu0 0.0
    %1702 = vmatprep.subr.mxu0 0.0
    %1703 = vmatpush1.msra.mxu0 0.0
    %1704 = vmatprep.subr.mxu0 0.0
    %1705 = vmatpush1.msra.mxu0 0.0
    %1706 = vmatprep.subr.mxu0 0.0
    %1707 = vmatpush1.msra.mxu0 0.0
    %1708 = vmatprep.subr.mxu0 0.0
    %1709 = vmatpush1.msra.mxu0 0.0
    %1710 = vmatprep.subr.mxu0 0.0
    %1711 = vmatpush1.msra.mxu0 0.0
    %1712 = vmatprep.subr.mxu0 0.0
    %1713 = vmatpush1.msra.mxu0 0.0
    %1714 = vmatprep.subr.mxu0 0.0
    %1715 = vmatpush1.msra.mxu0 0.0
    %1716 = vmatprep.subr.mxu0 0.0
    %1717 = vmatpush1.msra.mxu0 0.0
    %1718 = vmatprep.subr.mxu0 0.0
    %1719 = vmatpush1.msra.mxu0 0.0
    %1720 = vmatprep.mubr.f32.mxu0 0.0
    %1721 = vmatmul.mubr.f32.gmra.mrb[0].mxu0 %v1651
    %v1722 = vpop.f32.mrb[0].mxu0
    %v1723 = vadd.f32 0.0, %v1722
    %v1724 = vpop.f32.mrb[0].mxu0
    %1725 = vmatprep.mubr.f32.mxu0 0.0
    %1726 = vmatmul.mubr.f32.gmra.mrb[0].mxu0 %v1654
    %v1727 = vpop.f32.mrb[0].mxu0
    %v1728 = vadd.f32 0.0, %v1727
    %v1729 = vpop.f32.mrb[0].mxu0
    %1730 = vdwg.mxu0
    %v1732 = vsel %vm185, %v1409, 0
    %v1735 = vsel %vm185, %v1485, 0
    %1737 = vmatprep.subr.mxu0 0.0
    %1738 = vmatpush1.msra.mxu0 %v36
    %1739 = vmatprep.subr.mxu0 0.0
    %1740 = vmatpush1.msra.mxu0 0.0
    %1741 = vmatprep.subr.mxu0 0.0
    %1742 = vmatpush1.msra.mxu0 0.0
    %1743 = vmatprep.subr.mxu0 0.0
    %1744 = vmatpush1.msra.mxu0 0.0
    %1745 = vmatprep.subr.mxu0 0.0
    %1746 = vmatpush1.msra.mxu0 0.0
    %1747 = vmatprep.subr.mxu0 0.0
    %1748 = vmatpush1.msra.mxu0 0.0
    %1749 = vmatprep.subr.mxu0 0.0
    %1750 = vmatpush1.msra.mxu0 0.0
    %1751 = vmatprep.subr.mxu0 0.0
    %1752 = vmatpush1.msra.mxu0 0.0
    %1753 = vmatprep.subr.mxu0 0.0
    %1754 = vmatpush1.msra.mxu0 0.0
    %1755 = vmatprep.subr.mxu0 0.0
    %1756 = vmatpush1.msra.mxu0 0.0
    %1757 = vmatprep.subr.mxu0 0.0
    %1758 = vmatpush1.msra.mxu0 0.0
    %1759 = vmatprep.subr.mxu0 0.0
    %1760 = vmatpush1.msra.mxu0 0.0
    %1761 = vmatprep.subr.mxu0 0.0
    %1762 = vmatpush1.msra.mxu0 0.0
    %1763 = vmatprep.subr.mxu0 0.0
    %1764 = vmatpush1.msra.mxu0 0.0
    %1765 = vmatprep.subr.mxu0 0.0
    %1766 = vmatpush1.msra.mxu0 0.0
    %1767 = vmatprep.subr.mxu0 0.0
    %1768 = vmatpush1.msra.mxu0 0.0
    %1769 = vmatprep.subr.mxu0 0.0
    %1770 = vmatpush1.msra.mxu0 0.0
    %1771 = vmatprep.subr.mxu0 0.0
    %1772 = vmatpush1.msra.mxu0 0.0
    %1773 = vmatprep.subr.mxu0 0.0
    %1774 = vmatpush1.msra.mxu0 0.0
    %1775 = vmatprep.subr.mxu0 0.0
    %1776 = vmatpush1.msra.mxu0 0.0
    %1777 = vmatprep.subr.mxu0 0.0
    %1778 = vmatpush1.msra.mxu0 0.0
    %1779 = vmatprep.subr.mxu0 0.0
    %1780 = vmatpush1.msra.mxu0 0.0
    %1781 = vmatprep.subr.mxu0 0.0
    %1782 = vmatpush1.msra.mxu0 0.0
    %1783 = vmatprep.subr.mxu0 0.0
    %1784 = vmatpush1.msra.mxu0 0.0
    %1785 = vmatprep.subr.mxu0 0.0
    %1786 = vmatpush1.msra.mxu0 0.0
    %1787 = vmatprep.subr.mxu0 0.0
    %1788 = vmatpush1.msra.mxu0 0.0
    %1789 = vmatprep.subr.mxu0 0.0
    %1790 = vmatpush1.msra.mxu0 0.0
    %1791 = vmatprep.subr.mxu0 0.0
    %1792 = vmatpush1.msra.mxu0 0.0
    %1793 = vmatprep.subr.mxu0 0.0
    %1794 = vmatpush1.msra.mxu0 0.0
    %1795 = vmatprep.subr.mxu0 0.0
    %1796 = vmatpush1.msra.mxu0 0.0
    %1797 = vmatprep.subr.mxu0 0.0
    %1798 = vmatpush1.msra.mxu0 0.0
    %1799 = vmatprep.subr.mxu0 0.0
    %1800 = vmatpush1.msra.mxu0 0.0
    %1801 = vmatprep.mubr.f32.mxu0 0.0
    %1802 = vmatmul.mubr.f32.gmra.mrb[0].mxu0 %v1732
    %v1803 = vpop.f32.mrb[0].mxu0
    %v1804 = vadd.f32 0.0, %v1803
    %v1805 = vpop.f32.mrb[0].mxu0
    %1806 = vmatprep.mubr.f32.mxu0 0.0
    %1807 = vmatmul.mubr.f32.gmra.mrb[0].mxu0 %v1735
    %v1808 = vpop.f32.mrb[0].mxu0
    %v1809 = vadd.f32 0.0, %v1808
    %v1810 = vpop.f32.mrb[0].mxu0
    %1811 = vdwg.mxu0
    %v1812 = vsel %vm44, %v1561, 0.0
    %v1813 = vsel %vm44, %v1642, 0.0
    %v1814 = vadd.f32 %v1812, %v1813
    %v1815 = vsel %vm44, %v1723, 0.0
    %v1816 = vadd.f32 %v1814, %v1815
    %v1817 = vsel %vm44, %v1804, 0.0
    %v1818 = vadd.f32 %v1816, %v1817
    %v1819 = vsel %vm44, %v1566, 0.0
    %v1820 = vsel %vm44, %v1647, 0.0
    %v1821 = vadd.f32 %v1819, %v1820
    %v1822 = vsel %vm44, %v1728, 0.0
    %v1823 = vadd.f32 %v1821, %v1822
    %v1824 = vsel %vm44, %v1809, 0.0
    %v1825 = vadd.f32 %v1823, %v1824
    %v1826 = vlaneseq
    %v1827 = vshrl.u32 %v1826, 7
    %v1828 = vsub.s32 4, %v1827
    %v1829 = vrot.slane %v41, %v1828
    %v1830 = vadd.f32 %v1818, %v1829
    %v1831 = vadd.f32 %v1825, %v1829
    %v1832 = vadd.f32 %v42, %v1830
    %v1833 = vadd.f32 %v43, %v1831
    %v1834 = vsel %vm44, %v1832, 0.0
    %1835 = vadd.xlane.f32.xlu0 %v1834
    %v1836 = vpop.xlane.xlu0 %1835
    %v1837 = vsel %vm44, %v1833, 0.0
    %1838 = vadd.xlane.f32.xlu0 %v1837
    %v1839 = vpop.xlane.xlu0 %1838
    %v1840 = vmul.f32 %v1836, %v51
    %v1841 = vmul.f32 %v1839, %v51
    %v1842 = vsub.f32 %v1832, %v1840
    %v1843 = vsub.f32 %v1833, %v1841
    %v1844 = vmul.f32 %v1842, %v1842
    %v1845 = vmul.f32 %v1843, %v1843
    %v1846 = vsel %vm44, %v1844, 0.0
    %1847 = vadd.xlane.f32.xlu0 %v1846
    %v1848 = vpop.xlane.xlu0 %1847
    %v1849 = vsel %vm44, %v1845, 0.0
    %1850 = vadd.xlane.f32.xlu0 %v1849
    %v1851 = vpop.xlane.xlu0 %1850
    %v1852 = vmul.f32 %v1848, %v51
    %v1853 = vmul.f32 %v1851, %v51
    %v1854 = vadd.f32 %v1852, 1e-05
    %v1855 = vadd.f32 %v1853, 1e-05
    %v1856 = vrsqrt.pop %v1854
    %v1857 = vrsqrt.pop %v1855
    %v1858 = vmul.f32 %v1842, %v1856
    %v1859 = vmul.f32 %v1843, %v1857
    %v1860 = vlaneseq
    %v1861 = vshrl.u32 %v1860, 7
    %v1862 = vsub.s32 2, %v1861
    %v1863 = vrot.slane %v41, %v1862
    %v1864 = vmul.f32 %v1858, %v1863
    %v1865 = vmul.f32 %v1859, %v1863
    %v1866 = vlaneseq
    %v1867 = vshrl.u32 %v1866, 7
    %v1868 = vsub.s32 3, %v1867
    %v1869 = vrot.slane %v41, %v1868
    %v1870 = vadd.f32 %v1864, %v1869
    %v1871 = vadd.f32 %v1865, %v1869
    %v1872 = vlaneseq
    %v1873 = vshrl.u32 %v1872, 7
    %v1874 = vsub.s32 6, %v1873
    %v1875 = vrot.slane %v41, %v1874
    %v1877 = vsel %vm44, %v1870, 0
    %v1880 = vsel %vm44, %v1871, 0
    %1882 = vmatprep.subr.mxu0 0.0
    %1883 = vmatpush1.msra.mxu0 %v37
    %1884 = vmatprep.subr.mxu0 0.0
    %1885 = vmatpush1.msra.mxu0 %v38
    %1886 = vmatprep.subr.mxu0 0.0
    %1887 = vmatpush1.msra.mxu0 %v39
    %1888 = vmatprep.subr.mxu0 0.0
    %1889 = vmatpush1.msra.mxu0 %v40
    %1890 = vmatprep.subr.mxu0 0.0
    %1891 = vmatpush1.msra.mxu0 0.0
    %1892 = vmatprep.subr.mxu0 0.0
    %1893 = vmatpush1.msra.mxu0 0.0
    %1894 = vmatprep.subr.mxu0 0.0
    %1895 = vmatpush1.msra.mxu0 0.0
    %1896 = vmatprep.subr.mxu0 0.0
    %1897 = vmatpush1.msra.mxu0 0.0
    %1898 = vmatprep.subr.mxu0 0.0
    %1899 = vmatpush1.msra.mxu0 0.0
    %1900 = vmatprep.subr.mxu0 0.0
    %1901 = vmatpush1.msra.mxu0 0.0
    %1902 = vmatprep.subr.mxu0 0.0
    %1903 = vmatpush1.msra.mxu0 0.0
    %1904 = vmatprep.subr.mxu0 0.0
    %1905 = vmatpush1.msra.mxu0 0.0
    %1906 = vmatprep.subr.mxu0 0.0
    %1907 = vmatpush1.msra.mxu0 0.0
    %1908 = vmatprep.subr.mxu0 0.0
    %1909 = vmatpush1.msra.mxu0 0.0
    %1910 = vmatprep.subr.mxu0 0.0
    %1911 = vmatpush1.msra.mxu0 0.0
    %1912 = vmatprep.subr.mxu0 0.0
    %1913 = vmatpush1.msra.mxu0 0.0
    %1914 = vmatprep.subr.mxu0 0.0
    %1915 = vmatpush1.msra.mxu0 0.0
    %1916 = vmatprep.subr.mxu0 0.0
    %1917 = vmatpush1.msra.mxu0 0.0
    %1918 = vmatprep.subr.mxu0 0.0
    %1919 = vmatpush1.msra.mxu0 0.0
    %1920 = vmatprep.subr.mxu0 0.0
    %1921 = vmatpush1.msra.mxu0 0.0
    %1922 = vmatprep.subr.mxu0 0.0
    %1923 = vmatpush1.msra.mxu0 0.0
    %1924 = vmatprep.subr.mxu0 0.0
    %1925 = vmatpush1.msra.mxu0 0.0
    %1926 = vmatprep.subr.mxu0 0.0
    %1927 = vmatpush1.msra.mxu0 0.0
    %1928 = vmatprep.subr.mxu0 0.0
    %1929 = vmatpush1.msra.mxu0 0.0
    %1930 = vmatprep.subr.mxu0 0.0
    %1931 = vmatpush1.msra.mxu0 0.0
    %1932 = vmatprep.subr.mxu0 0.0
    %1933 = vmatpush1.msra.mxu0 0.0
    %1934 = vmatprep.subr.mxu0 0.0
    %1935 = vmatpush1.msra.mxu0 0.0
    %1936 = vmatprep.subr.mxu0 0.0
    %1937 = vmatpush1.msra.mxu0 0.0
    %1938 = vmatprep.subr.mxu0 0.0
    %1939 = vmatpush1.msra.mxu0 0.0
    %1940 = vmatprep.subr.mxu0 0.0
    %1941 = vmatpush1.msra.mxu0 0.0
    %1942 = vmatprep.subr.mxu0 0.0
    %1943 = vmatpush1.msra.mxu0 0.0
    %1944 = vmatprep.subr.mxu0 0.0
    %1945 = vmatpush1.msra.mxu0 0.0
    %1946 = vmatprep.mubr.f32.mxu0 0.0
    %1947 = vmatmul.mubr.f32.gmra.mrb[0].mxu0 %v1877
    %v1948 = vpop.f32.mrb[0].mxu0
    %v1949 = vadd.f32 %v1875, %v1948
    %v1950 = vpop.f32.mrb[0].mxu0
    %1951 = vmatprep.mubr.f32.mxu0 0.0
    %1952 = vmatmul.mubr.f32.gmra.mrb[0].mxu0 %v1880
    %v1953 = vpop.f32.mrb[0].mxu0
    %v1954 = vadd.f32 %v1875, %v1953
    %v1955 = vpop.f32.mrb[0].mxu0
    %1956 = vdwg.mxu0
    %v1957 = vmul.f32 %v1949, 0.5
    %v1958 = vmul.f32 %v1954, 0.5
    %v1959 = vmul.f32 %v1949, 0.70710677
    %v1960 = vmul.f32 %v1954, 0.70710677
    %v1961 = verf.f32.pop %v1959
    %v1962 = verf.f32.pop %v1960
    %v1963 = vadd.f32 %v1961, 1.0
    %v1964 = vadd.f32 %v1962, 1.0
    %v1965 = vmul.f32 %v1957, %v1963
    %v1966 = vmul.f32 %v1958, %v1964
    %v1967 = vld [vmem:[%s2] sm:$0xff]
    %v1968 = vld [vmem:[%s2 + $0x8] sm:$0xff]
    %v1969 = vld [vmem:[%s2 + $0x10] sm:$0xff]
    %v1970 = vld [vmem:[%s2 + $0x18] sm:$0xff]
    %v1971 = vld [vmem:[%s2 + $0x20] sm:$0xff]
    %v1972 = vld [vmem:[%s2 + $0x28] sm:$0xff]
    %v1973 = vld [vmem:[%s2 + $0x30] sm:$0xff]
    %v1974 = vld [vmem:[%s2 + $0x38] sm:$0xff]
    %v1975 = vlaneseq
    %v1976 = vshrl.u32 %v1975, 7
    %v1977 = vsub.s32 5, %v1976
    %v1978 = vrot.slane %v41, %v1977
    %vm1979 = vcmask 523264
    %v1981 = vsel %vm1979, %v1965, 0
    %v1984 = vsel %vm1979, %v1966, 0
    %1986 = vmatprep.subr.mxu0 0.0
    %1987 = vmatpush1.msra.mxu0 %v1967
    %1988 = vmatprep.subr.mxu0 0.0
    %1989 = vmatpush1.msra.mxu0 %v1968
    %1990 = vmatprep.subr.mxu0 0.0
    %1991 = vmatpush1.msra.mxu0 %v1969
    %1992 = vmatprep.subr.mxu0 0.0
    %1993 = vmatpush1.msra.mxu0 %v1970
    %1994 = vmatprep.subr.mxu0 0.0
    %1995 = vmatpush1.msra.mxu0 %v1971
    %1996 = vmatprep.subr.mxu0 0.0
    %1997 = vmatpush1.msra.mxu0 %v1972
    %1998 = vmatprep.subr.mxu0 0.0
    %1999 = vmatpush1.msra.mxu0 %v1973
    %2000 = vmatprep.subr.mxu0 0.0
    %2001 = vmatpush1.msra.mxu0 %v1974
    %2002 = vmatprep.subr.mxu0 0.0
    %2003 = vmatpush1.msra.mxu0 0.0
    %2004 = vmatprep.subr.mxu0 0.0
    %2005 = vmatpush1.msra.mxu0 0.0
    %2006 = vmatprep.subr.mxu0 0.0
    %2007 = vmatpush1.msra.mxu0 0.0
    %2008 = vmatprep.subr.mxu0 0.0
    %2009 = vmatpush1.msra.mxu0 0.0
    %2010 = vmatprep.subr.mxu0 0.0
    %2011 = vmatpush1.msra.mxu0 0.0
    %2012 = vmatprep.subr.mxu0 0.0
    %2013 = vmatpush1.msra.mxu0 0.0
    %2014 = vmatprep.subr.mxu0 0.0
    %2015 = vmatpush1.msra.mxu0 0.0
    %2016 = vmatprep.subr.mxu0 0.0
    %2017 = vmatpush1.msra.mxu0 0.0
    %2018 = vmatprep.subr.mxu0 0.0
    %2019 = vmatpush1.msra.mxu0 0.0
    %2020 = vmatprep.subr.mxu0 0.0
    %2021 = vmatpush1.msra.mxu0 0.0
    %2022 = vmatprep.subr.mxu0 0.0
    %2023 = vmatpush1.msra.mxu0 0.0
    %2024 = vmatprep.subr.mxu0 0.0
    %2025 = vmatpush1.msra.mxu0 0.0
    %2026 = vmatprep.subr.mxu0 0.0
    %2027 = vmatpush1.msra.mxu0 0.0
    %2028 = vmatprep.subr.mxu0 0.0
    %2029 = vmatpush1.msra.mxu0 0.0
    %2030 = vmatprep.subr.mxu0 0.0
    %2031 = vmatpush1.msra.mxu0 0.0
    %2032 = vmatprep.subr.mxu0 0.0
    %2033 = vmatpush1.msra.mxu0 0.0
    %2034 = vmatprep.subr.mxu0 0.0
    %2035 = vmatpush1.msra.mxu0 0.0
    %2036 = vmatprep.subr.mxu0 0.0
    %2037 = vmatpush1.msra.mxu0 0.0
    %2038 = vmatprep.subr.mxu0 0.0
    %2039 = vmatpush1.msra.mxu0 0.0
    %2040 = vmatprep.subr.mxu0 0.0
    %2041 = vmatpush1.msra.mxu0 0.0
    %2042 = vmatprep.subr.mxu0 0.0
    %2043 = vmatpush1.msra.mxu0 0.0
    %2044 = vmatprep.subr.mxu0 0.0
    %2045 = vmatpush1.msra.mxu0 0.0
    %2046 = vmatprep.subr.mxu0 0.0
    %2047 = vmatpush1.msra.mxu0 0.0
    %2048 = vmatprep.subr.mxu0 0.0
    %2049 = vmatpush1.msra.mxu0 0.0
    %2050 = vmatprep.mubr.f32.mxu0 0.0
    %2051 = vmatmul.mubr.f32.gmra.mrb[0].mxu0 %v1981
    %v2052 = vpop.f32.mrb[0].mxu0
    %v2053 = vadd.f32 %v1978, %v2052
    %v2054 = vpop.f32.mrb[0].mxu0
    %2055 = vmatprep.mubr.f32.mxu0 0.0
    %2056 = vmatmul.mubr.f32.gmra.mrb[0].mxu0 %v1984
    %v2057 = vpop.f32.mrb[0].mxu0
    %v2058 = vadd.f32 %v1978, %v2057
    %v2059 = vpop.f32.mrb[0].mxu0
    %2060 = vdwg.mxu0
    %v2061 = vadd.f32 %v1832, %v2053
    %v2062 = vadd.f32 %v1833, %v2058
    %2063 = vst.msk [vmem:[#allocation5] sm:$0xff] %vm44, %v2061
    %2064 = vst.msk [vmem:[#allocation5 + $0x8] sm:$0xff] %vm44, %v2062
    // Predicated region
    $region18: #{tpu_custom_call.1} parent=1 // pred_check
      _
    $region19: #{tpu_custom_call.1} parent=1 // pred_check_branch
      %2066 = sbr.rel (0) target = $region21
    $region20: #{tpu_custom_call.1} parent=1 // pred_region
      %s2068 = ssub.s32 256, 256
      %2069 = vsyncadd [#allocation4], %s2068
      %s2070 = sshll.u32 [#allocation5], 4
      %s2071 = int_to_ptr.vmem [resolvable:$true] %s2070
      %2076 = dma.vmem_to_hbm [thread:$0]  %s2071, 256, %s3, [#allocation4], 128, 128, 8
    $region21: #{tpu_custom_call.1} parent=1 // pred_fallthru
      _
    // Predicated region
    $region22: #{tpu_custom_call.1} parent=1 // pred_check
      _
    $region23: #{tpu_custom_call.1} parent=1 // pred_check_branch
      %2078 = sbr.rel (0) target = $region25
    $region24: #{tpu_custom_call.1} parent=1 // pred_region
      %2079 = dma.done [#allocation4], 256
    $region25: #{tpu_custom_call.1} parent=1 // pred_fallthru
      _
    %2080 = vsyncpa [#allocation3], 1
    %2081 = vsyncpa [#allocation4], 1

</llo_original>
